<compile_context>
chip_gen: v7x
topology: tpu7x:2x2x1
jax: 0.10.0
libtpu: 0.0.40
codegen_flags: <defaults>
</compile_context>

<pallas_src>
import math
from functools import partial

import jax
import jax.numpy as jnp
from jax import lax
from jax.experimental import pallas as pl
from jax.experimental.pallas import tpu as pltpu


# --------------------------------------------------------------------------
# Kernel: Kb full SimpleMLPs (3 linears + 2 ReLU + residual [+ layernorm])
# per grid step, over one (bt, dim_in) batch tile. Weights stream as bf16,
# accumulation is f32 on the MXU, elementwise stays f32 on the VPU.
# --------------------------------------------------------------------------
def _decoder_kernel(x_ref, w1_ref, b1_ref, w2_ref, b2_ref, w3_ref, b3_ref,
                    *rest, kb, use_norm, eps=1e-5):
    if use_norm:
        g_ref, bt_ref, o_ref = rest
    else:
        (o_ref,) = rest

    x = x_ref[...].astype(jnp.float32)          # (bt, dim_in) f32 activations
    x_mm = x.astype(w1_ref.dtype)               # MXU-side copy (bf16 or f32)

    for k in range(kb):                         # Kb decoders per grid step
        # Linear 1 + ReLU  (MXU, f32 accumulate)
        h = jnp.dot(x_mm, w1_ref[k],
                    preferred_element_type=jnp.float32) + b1_ref[k]
        h = jnp.maximum(h, 0.0)

        # Linear 2 + ReLU
        h = jnp.dot(h.astype(w2_ref.dtype), w2_ref[k],
                    preferred_element_type=jnp.float32) + b2_ref[k]
        h = jnp.maximum(h, 0.0)

        # residual (SimpleMLP.residual=True)
        h = h + x

        # Linear 3 (projection to out_len * d_model)
        y = jnp.dot(h.astype(w3_ref.dtype), w3_ref[k],
                    preferred_element_type=jnp.float32) + b3_ref[k]

        if use_norm:
            # One-pass LayerNorm statistics (sum + sum-of-squares); rsqrt -> EUP.
            n = y.shape[-1]
            s = jnp.sum(y, axis=-1, keepdims=True)
            ss = jnp.sum(y * y, axis=-1, keepdims=True)
            mu = s * (1.0 / n)
            var = ss * (1.0 / n) - mu * mu
            y = (y - mu) * lax.rsqrt(var + eps) * g_ref[k] + bt_ref[k]

        o_ref[k] = y.astype(o_ref.dtype)        # lane-dense store (dim_out lanes)


# --------------------------------------------------------------------------
# Tiling heuristics.
# --------------------------------------------------------------------------
def _choose_bt(B, cap=256):
    """Batch tile: full B if small, else a multiple of 8 dividing B (<= cap)."""
    if B <= cap:
        return B
    for bt in range(cap, 7, -8):
        if B % bt == 0:
            return bt
    return B


def _choose_kb(K, dim_in, dim_out, w_itemsize, nb, vmem_budget):
    """Decoders per grid step: as many as fit VMEM, but keep >=2 grid steps
    (v7x megacore) unless the B axis already provides them."""
    per_dec = (2 * dim_in * dim_in + dim_in * dim_out) * w_itemsize * 2  # dbl-buf
    kb = K if (nb >= 2 or K == 1) else max(1, K // 2)
    while kb > 1 and (K % kb != 0 or kb * per_dec > vmem_budget):
        kb -= 1
    return kb


# --------------------------------------------------------------------------
# Wrapper reproducing SimpleDecoder.forward.
# params (stored f32; w* cast to `weights_dtype` for streaming):
#   w1, w2 : (K, dim_in, dim_in)   (x @ W layout, i.e. torch W^T)
#   b1, b2 : (K, 1, dim_in)
#   w3     : (K, dim_in, dim_out)
#   b3     : (K, 1, dim_out)
#   gamma, beta (only if norm) : (K, 1, dim_out)
# --------------------------------------------------------------------------
def simple_decoder_forward(x, cross, params, *, out_len, norm=False,
                           weights_dtype=jnp.bfloat16,
                           x_mask=None, cross_mask=None):
    del x, x_mask, cross_mask                      # unused by the torch forward
    B = cross.shape[0]
    d_model = cross.shape[-1]
    cross_flat = cross.reshape(B, -1).astype(jnp.float32)      # (B, dim_in)
    dim_in = cross_flat.shape[-1]
    K = params["w1"].shape[0]
    dim_out = params["w3"].shape[-1]
    assert dim_out == out_len * d_model

    # Weights streamed in a narrow dtype; biases / LN affine stay f32 (tiny).
    w1 = params["w1"].astype(weights_dtype)
    w2 = params["w2"].astype(weights_dtype)
    w3 = params["w3"].astype(weights_dtype)
    b1 = params["b1"].astype(jnp.float32)
    b2 = params["b2"].astype(jnp.float32)
    b3 = params["b3"].astype(jnp.float32)
    w_itemsize = jnp.dtype(weights_dtype).itemsize

    bt = _choose_bt(B)
    nb = B // bt
    vmem_budget = 40 * 1024 * 1024                 # weight-block budget
    kb = _choose_kb(K, dim_in, dim_out, w_itemsize, nb, vmem_budget)
    kg = K // kb

    in_arrays = [cross_flat, w1, b1, w2, b2, w3, b3]
    # Grid = (decoder-group, B-tile); B-tile is INNERMOST and the weight
    # index_maps ignore it, so each decoder block's weights are DMA'd once
    # and stay VMEM-resident across all batch tiles.
    in_specs = [
        pl.BlockSpec((bt, dim_in), lambda g, b: (b, 0)),             # cross
        pl.BlockSpec((kb, dim_in, dim_in), lambda g, b: (g, 0, 0)),  # w1
        pl.BlockSpec((kb, 1, dim_in), lambda g, b: (g, 0, 0)),       # b1
        pl.BlockSpec((kb, dim_in, dim_in), lambda g, b: (g, 0, 0)),  # w2
        pl.BlockSpec((kb, 1, dim_in), lambda g, b: (g, 0, 0)),       # b2
        pl.BlockSpec((kb, dim_in, dim_out), lambda g, b: (g, 0, 0)), # w3
        pl.BlockSpec((kb, 1, dim_out), lambda g, b: (g, 0, 0)),      # b3
    ]
    if norm:
        in_arrays += [params["gamma"].astype(jnp.float32),
                      params["beta"].astype(jnp.float32)]
        in_specs += [
            pl.BlockSpec((kb, 1, dim_out), lambda g, b: (g, 0, 0)),
            pl.BlockSpec((kb, 1, dim_out), lambda g, b: (g, 0, 0)),
        ]

    # Explicit scoped-VMEM limit with headroom under v7x's 64 MiB physical.
    w_block = kb * (2 * dim_in * dim_in + dim_in * dim_out) * w_itemsize
    b_block = kb * (2 * dim_in + dim_out) * 4 + (kb * 2 * dim_out * 4 if norm else 0)
    io_block = bt * dim_in * 4 + kb * bt * dim_out * 4
    live_act = 4 * bt * (3 * dim_in + 2 * dim_out)
    vmem_needed = 2 * (w_block + b_block + io_block) + live_act
    vmem_limit = int(min(56 * 1024 * 1024,
                         max(2 * vmem_needed, 16 * 1024 * 1024)))

    flops = K * B * (4 * dim_in * dim_in + 2 * dim_in * dim_out)
    transcendentals = K * B if norm else 0
    bytes_accessed = (4 * B * dim_in
                      + w_itemsize * K * (2 * dim_in * dim_in + dim_in * dim_out)
                      + 4 * K * (2 * dim_in + dim_out)
                      + (8 * K * dim_out if norm else 0)
                      + 4 * K * B * dim_out)

    out_kbd = pl.pallas_call(
        partial(_decoder_kernel, kb=kb, use_norm=norm),
        out_shape=jax.ShapeDtypeStruct((K, B, dim_out), jnp.float32),
        grid=(kg, nb),
        in_specs=in_specs,
        out_specs=pl.BlockSpec((kb, bt, dim_out), lambda g, b: (g, b, 0)),
        compiler_params=pltpu.CompilerParams(
            dimension_semantics=("parallel", "parallel"),
            vmem_limit_bytes=vmem_limit),
        cost_estimate=pl.CostEstimate(flops=flops,
                                      transcendentals=transcendentals,
                                      bytes_accessed=bytes_accessed),
    )(*in_arrays)                                               # (K, B, dim_out)

    # (K, B, out_len*d_model) -> (B, out_len, K, d_model)  (layout plumbing only;
    # keeping the kernel output lane-dense avoids masked vst with d_model=32).
    out = out_kbd.reshape(K, B, out_len, d_model)
    out = jnp.transpose(out, (1, 2, 0, 3))
    return out.astype(cross.dtype)

    # TODO(synk): optional int8 weight path (per-channel scales) for v5e/v6e
    # only — v7x's MXU has no integer path, so it must be gated per generation.


# --------------------------------------------------------------------------
# Deterministic parameter construction (xavier-uniform, zero bias, matching
# the torch init structure; weights stored as (dim_in, dim_out) = torch W^T).
# --------------------------------------------------------------------------
def make_params(key, K, dim_in, dim_out, norm=False):
    ks = jax.random.split(key, 3 * K)

    def xavier(k, fan_in, fan_out):
        lim = math.sqrt(6.0 / (fan_in + fan_out))
        return jax.random.uniform(k, (fan_in, fan_out), jnp.float32, -lim, lim)

    w1 = jnp.stack([xavier(ks[3 * i + 0], dim_in, dim_in) for i in range(K)])
    w2 = jnp.stack([xavier(ks[3 * i + 1], dim_in, dim_in) for i in range(K)])
    w3 = jnp.stack([xavier(ks[3 * i + 2], dim_in, dim_out) for i in range(K)])
    params = {
        "w1": w1, "b1": jnp.zeros((K, 1, dim_in), jnp.float32),
        "w2": w2, "b2": jnp.zeros((K, 1, dim_in), jnp.float32),
        "w3": w3, "b3": jnp.zeros((K, 1, dim_out), jnp.float32),
    }
    if norm:
        params["gamma"] = jnp.ones((K, 1, dim_out), jnp.float32)
        params["beta"] = jnp.zeros((K, 1, dim_out), jnp.float32)
    return params


# --------------------------------------------------------------------------
# Pure-JAX reference (mirrors the PyTorch module exactly, f32 throughout).
# --------------------------------------------------------------------------
def reference_forward(cross, params, *, out_len, norm=False, eps=1e-5):
    B = cross.shape[0]
    d_model = cross.shape[-1]
    xf = cross.reshape(B, -1)
    K = params["w1"].shape[0]
    outs = []
    for k in range(K):
        h = jax.nn.relu(xf @ params["w1"][k] + params["b1"][k][0])
        h = jax.nn.relu(h @ params["w2"][k] + params["b2"][k][0])
        h = h + xf
        y = h @ params["w3"][k] + params["b3"][k][0]
        if norm:
            mu = y.mean(-1, keepdims=True)
            var = ((y - mu) ** 2).mean(-1, keepdims=True)
            y = (y - mu) / jnp.sqrt(var + eps) * params["gamma"][k][0] \
                + params["beta"][k][0]
        outs.append(y.reshape(B, out_len, d_model))
    return jnp.stack(outs, axis=2)                      # (B, out_len, K, d_model)


if __name__ == "__main__":
    key = jax.random.PRNGKey(0)
    B, in_len, d_model, K, out_len = 2, 8, 32, 4, 8
    dim_in, dim_out = in_len * d_model, out_len * d_model

    k_cross, k_x, k_par = jax.random.split(key, 3)
    cross = jax.random.normal(k_cross, (B, in_len, d_model), dtype=jnp.float32)
    x_in = jax.random.normal(k_x, (B, out_len, d_model), dtype=jnp.float32)  # unused by forward

    # 1) Exact-semantics check: f32 weights, no LayerNorm.
    params = make_params(k_par, K, dim_in, dim_out, norm=False)
    out = simple_decoder_forward(x_in, cross, params, out_len=out_len,
                                 norm=False, weights_dtype=jnp.float32)
    out = jax.block_until_ready(out)
    assert out.shape == (B, out_len, K, d_model)
    ref = reference_forward(cross, params, out_len=out_len, norm=False)
    assert jnp.allclose(out, ref, atol=1e-4, rtol=1e-4), \
        float(jnp.max(jnp.abs(out - ref)))

    # 2) Exact-semantics check: f32 weights, with LayerNorm.
    params_n = make_params(k_par, K, dim_in, dim_out, norm=True)
    out_n = simple_decoder_forward(x_in, cross, params_n, out_len=out_len,
                                   norm=True, weights_dtype=jnp.float32)
    out_n = jax.block_until_ready(out_n)
    ref_n = reference_forward(cross, params_n, out_len=out_len, norm=True)
    assert jnp.allclose(out_n, ref_n, atol=1e-3, rtol=1e-3), \
        float(jnp.max(jnp.abs(out_n - ref_n)))

    # 3) Performance-default path: bf16-streamed weights (f32 MXU accumulate).
    out_bf = simple_decoder_forward(x_in, cross, params_n, out_len=out_len,
                                    norm=True, weights_dtype=jnp.bfloat16)
    out_bf = jax.block_until_ready(out_bf)
    assert out_bf.shape == (B, out_len, K, d_model)
    assert jnp.allclose(out_bf, ref_n, atol=8e-2, rtol=8e-2), \
        float(jnp.max(jnp.abs(out_bf - ref_n)))

    print("KERNEL_OK")
</pallas_src>

<mosaic_0001>
module attributes {stable_mosaic.version = 11 : i64} {
  func.func @_decoder_kernel(%arg0: i32, %arg1: i32, %arg2: memref<2x256xf32, #tpu.memory_space<vmem>>, %arg3: memref<2x256x256xf32, #tpu.memory_space<vmem>>, %arg4: memref<2x1x256xf32, #tpu.memory_space<vmem>>, %arg5: memref<2x256x256xf32, #tpu.memory_space<vmem>>, %arg6: memref<2x1x256xf32, #tpu.memory_space<vmem>>, %arg7: memref<2x256x256xf32, #tpu.memory_space<vmem>>, %arg8: memref<2x1x256xf32, #tpu.memory_space<vmem>>, %arg9: memref<2x2x256xf32, #tpu.memory_space<vmem>>) attributes {dimension_semantics = [#tpu.dimension_semantics<parallel>, #tpu.dimension_semantics<parallel>], iteration_bounds = array<i64: 2, 1>, scalar_prefetch = 0 : i64, scratch_operands = 0 : i64, tpu.core_type = #tpu.core_type<tc>, window_params = [{transform_indices = @transform_0, window_bounds = array<i64: 2, 256>}, {transform_indices = @transform_1, window_bounds = array<i64: 2, 256, 256>}, {transform_indices = @transform_2, window_bounds = array<i64: 2, 1, 256>}, {transform_indices = @transform_3, window_bounds = array<i64: 2, 256, 256>}, {transform_indices = @transform_4, window_bounds = array<i64: 2, 1, 256>}, {transform_indices = @transform_5, window_bounds = array<i64: 2, 256, 256>}, {transform_indices = @transform_6, window_bounds = array<i64: 2, 1, 256>}, {transform_indices = @transform_7, window_bounds = array<i64: 2, 2, 256>}]} {
    %c0 = arith.constant 0 : index
    %c0_0 = arith.constant 0 : index
    %0 = vector.load %arg2[%c0, %c0_0] : memref<2x256xf32, #tpu.memory_space<vmem>>, vector<2x256xf32>
    %c0_1 = arith.constant 0 : index
    %c0_2 = arith.constant 0 : index
    %c0_3 = arith.constant 0 : index
    %1 = vector.load %arg3[%c0_1, %c0_2, %c0_3] : memref<2x256x256xf32, #tpu.memory_space<vmem>>, vector<1x256x256xf32>
    %2 = vector.shape_cast %1 : vector<1x256x256xf32> to vector<256x256xf32>
    %cst = arith.constant dense<0.000000e+00> : vector<2x256xf32>
    %3 = tpu.matmul %0, %2, %cst {dimension_numbers = #tpu.dot_dimension_numbers<[1], [0], [0], [1], [0, 0, 1, 1], [], []>} : vector<2x256xf32>, vector<256x256xf32>, vector<2x256xf32> -> vector<2x256xf32>
    %c0_4 = arith.constant 0 : index
    %c0_5 = arith.constant 0 : index
    %c0_6 = arith.constant 0 : index
    %4 = vector.load %arg4[%c0_4, %c0_5, %c0_6] : memref<2x1x256xf32, #tpu.memory_space<vmem>>, vector<1x1x256xf32>
    %5 = vector.shape_cast %4 : vector<1x1x256xf32> to vector<1x256xf32>
    %6 = vector.broadcast %5 : vector<1x256xf32> to vector<2x256xf32>
    %7 = arith.addf %3, %6 : vector<2x256xf32>
    %cst_7 = arith.constant 0.000000e+00 : f32
    %8 = vector.broadcast %cst_7 : f32 to vector<2x256xf32>
    %9 = arith.maximumf %7, %8 : vector<2x256xf32>
    %c0_8 = arith.constant 0 : index
    %c0_9 = arith.constant 0 : index
    %c0_10 = arith.constant 0 : index
    %10 = vector.load %arg5[%c0_8, %c0_9, %c0_10] : memref<2x256x256xf32, #tpu.memory_space<vmem>>, vector<1x256x256xf32>
    %11 = vector.shape_cast %10 : vector<1x256x256xf32> to vector<256x256xf32>
    %cst_11 = arith.constant dense<0.000000e+00> : vector<2x256xf32>
    %12 = tpu.matmul %9, %11, %cst_11 {dimension_numbers = #tpu.dot_dimension_numbers<[1], [0], [0], [1], [0, 0, 1, 1], [], []>} : vector<2x256xf32>, vector<256x256xf32>, vector<2x256xf32> -> vector<2x256xf32>
    %c0_12 = arith.constant 0 : index
    %c0_13 = arith.constant 0 : index
    %c0_14 = arith.constant 0 : index
    %13 = vector.load %arg6[%c0_12, %c0_13, %c0_14] : memref<2x1x256xf32, #tpu.memory_space<vmem>>, vector<1x1x256xf32>
    %14 = vector.shape_cast %13 : vector<1x1x256xf32> to vector<1x256xf32>
    %15 = vector.broadcast %14 : vector<1x256xf32> to vector<2x256xf32>
    %16 = arith.addf %12, %15 : vector<2x256xf32>
    %cst_15 = arith.constant 0.000000e+00 : f32
    %17 = vector.broadcast %cst_15 : f32 to vector<2x256xf32>
    %18 = arith.maximumf %16, %17 : vector<2x256xf32>
    %19 = arith.addf %18, %0 : vector<2x256xf32>
    %c0_16 = arith.constant 0 : index
    %c0_17 = arith.constant 0 : index
    %c0_18 = arith.constant 0 : index
    %20 = vector.load %arg7[%c0_16, %c0_17, %c0_18] : memref<2x256x256xf32, #tpu.memory_space<vmem>>, vector<1x256x256xf32>
    %21 = vector.shape_cast %20 : vector<1x256x256xf32> to vector<256x256xf32>
    %cst_19 = arith.constant dense<0.000000e+00> : vector<2x256xf32>
    %22 = tpu.matmul %19, %21, %cst_19 {dimension_numbers = #tpu.dot_dimension_numbers<[1], [0], [0], [1], [0, 0, 1, 1], [], []>} : vector<2x256xf32>, vector<256x256xf32>, vector<2x256xf32> -> vector<2x256xf32>
    %c0_20 = arith.constant 0 : index
    %c0_21 = arith.constant 0 : index
    %c0_22 = arith.constant 0 : index
    %23 = vector.load %arg8[%c0_20, %c0_21, %c0_22] : memref<2x1x256xf32, #tpu.memory_space<vmem>>, vector<1x1x256xf32>
    %24 = vector.shape_cast %23 : vector<1x1x256xf32> to vector<1x256xf32>
    %25 = vector.broadcast %24 : vector<1x256xf32> to vector<2x256xf32>
    %26 = arith.addf %22, %25 : vector<2x256xf32>
    %c0_23 = arith.constant 0 : index
    %c0_24 = arith.constant 0 : index
    %c0_25 = arith.constant 0 : index
    %27 = vector.load %arg9[%c0_23, %c0_24, %c0_25] : memref<2x2x256xf32, #tpu.memory_space<vmem>>, vector<1x2x256xf32>
    %28 = vector.shape_cast %27 : vector<1x2x256xf32> to vector<2x256xf32>
    %29 = vector.shape_cast %26 : vector<2x256xf32> to vector<1x2x256xf32>
    tpu.vector_store %arg9[%c0_23, %c0_24, %c0_25], %29 {strides = array<i32>} : memref<2x2x256xf32, #tpu.memory_space<vmem>>, vector<1x2x256xf32>,
    %c1 = arith.constant 1 : index
    %c0_26 = arith.constant 0 : index
    %c0_27 = arith.constant 0 : index
    %30 = vector.load %arg3[%c1, %c0_26, %c0_27] : memref<2x256x256xf32, #tpu.memory_space<vmem>>, vector<1x256x256xf32>
    %31 = vector.shape_cast %30 : vector<1x256x256xf32> to vector<256x256xf32>
    %cst_28 = arith.constant dense<0.000000e+00> : vector<2x256xf32>
    %32 = tpu.matmul %0, %31, %cst_28 {dimension_numbers = #tpu.dot_dimension_numbers<[1], [0], [0], [1], [0, 0, 1, 1], [], []>} : vector<2x256xf32>, vector<256x256xf32>, vector<2x256xf32> -> vector<2x256xf32>
    %c1_29 = arith.constant 1 : index
    %c0_30 = arith.constant 0 : index
    %c0_31 = arith.constant 0 : index
    %33 = vector.load %arg4[%c1_29, %c0_30, %c0_31] : memref<2x1x256xf32, #tpu.memory_space<vmem>>, vector<1x1x256xf32>
    %34 = vector.shape_cast %33 : vector<1x1x256xf32> to vector<1x256xf32>
    %35 = vector.broadcast %34 : vector<1x256xf32> to vector<2x256xf32>
    %36 = arith.addf %32, %35 : vector<2x256xf32>
    %cst_32 = arith.constant 0.000000e+00 : f32
    %37 = vector.broadcast %cst_32 : f32 to vector<2x256xf32>
    %38 = arith.maximumf %36, %37 : vector<2x256xf32>
    %c1_33 = arith.constant 1 : index
    %c0_34 = arith.constant 0 : index
    %c0_35 = arith.constant 0 : index
    %39 = vector.load %arg5[%c1_33, %c0_34, %c0_35] : memref<2x256x256xf32, #tpu.memory_space<vmem>>, vector<1x256x256xf32>
    %40 = vector.shape_cast %39 : vector<1x256x256xf32> to vector<256x256xf32>
    %cst_36 = arith.constant dense<0.000000e+00> : vector<2x256xf32>
    %41 = tpu.matmul %38, %40, %cst_36 {dimension_numbers = #tpu.dot_dimension_numbers<[1], [0], [0], [1], [0, 0, 1, 1], [], []>} : vector<2x256xf32>, vector<256x256xf32>, vector<2x256xf32> -> vector<2x256xf32>
    %c1_37 = arith.constant 1 : index
    %c0_38 = arith.constant 0 : index
    %c0_39 = arith.constant 0 : index
    %42 = vector.load %arg6[%c1_37, %c0_38, %c0_39] : memref<2x1x256xf32, #tpu.memory_space<vmem>>, vector<1x1x256xf32>
    %43 = vector.shape_cast %42 : vector<1x1x256xf32> to vector<1x256xf32>
    %44 = vector.broadcast %43 : vector<1x256xf32> to vector<2x256xf32>
    %45 = arith.addf %41, %44 : vector<2x256xf32>
    %cst_40 = arith.constant 0.000000e+00 : f32
    %46 = vector.broadcast %cst_40 : f32 to vector<2x256xf32>
    %47 = arith.maximumf %45, %46 : vector<2x256xf32>
    %48 = arith.addf %47, %0 : vector<2x256xf32>
    %c1_41 = arith.constant 1 : index
    %c0_42 = arith.constant 0 : index
    %c0_43 = arith.constant 0 : index
    %49 = vector.load %arg7[%c1_41, %c0_42, %c0_43] : memref<2x256x256xf32, #tpu.memory_space<vmem>>, vector<1x256x256xf32>
    %50 = vector.shape_cast %49 : vector<1x256x256xf32> to vector<256x256xf32>
    %cst_44 = arith.constant dense<0.000000e+00> : vector<2x256xf32>
    %51 = tpu.matmul %48, %50, %cst_44 {dimension_numbers = #tpu.dot_dimension_numbers<[1], [0], [0], [1], [0, 0, 1, 1], [], []>} : vector<2x256xf32>, vector<256x256xf32>, vector<2x256xf32> -> vector<2x256xf32>
    %c1_45 = arith.constant 1 : index
    %c0_46 = arith.constant 0 : index
    %c0_47 = arith.constant 0 : index
    %52 = vector.load %arg8[%c1_45, %c0_46, %c0_47] : memref<2x1x256xf32, #tpu.memory_space<vmem>>, vector<1x1x256xf32>
    %53 = vector.shape_cast %52 : vector<1x1x256xf32> to vector<1x256xf32>
    %54 = vector.broadcast %53 : vector<1x256xf32> to vector<2x256xf32>
    %55 = arith.addf %51, %54 : vector<2x256xf32>
    %c1_48 = arith.constant 1 : index
    %c0_49 = arith.constant 0 : index
    %c0_50 = arith.constant 0 : index
    %56 = vector.load %arg9[%c1_48, %c0_49, %c0_50] : memref<2x2x256xf32, #tpu.memory_space<vmem>>, vector<1x2x256xf32>
    %57 = vector.shape_cast %56 : vector<1x2x256xf32> to vector<2x256xf32>
    %58 = vector.shape_cast %55 : vector<2x256xf32> to vector<1x2x256xf32>
    tpu.vector_store %arg9[%c1_48, %c0_49, %c0_50], %58 {strides = array<i32>} : memref<2x2x256xf32, #tpu.memory_space<vmem>>, vector<1x2x256xf32>,
    return
  }
  func.func @transform_0(%arg0: i32, %arg1: i32) -> (i32, i32) {
    %c0_i32 = arith.constant 0 : i32
    %c0_i32_0 = arith.constant 0 : i32
    return %arg1, %c0_i32 : i32, i32
  }
  func.func @transform_1(%arg0: i32, %arg1: i32) -> (i32, i32, i32) {
    %c0_i32 = arith.constant 0 : i32
    %c0_i32_0 = arith.constant 0 : i32
    %c0_i32_1 = arith.constant 0 : i32
    return %arg0, %c0_i32, %c0_i32_0 : i32, i32, i32
  }
  func.func @transform_2(%arg0: i32, %arg1: i32) -> (i32, i32, i32) {
    %c0_i32 = arith.constant 0 : i32
    %c0_i32_0 = arith.constant 0 : i32
    %c0_i32_1 = arith.constant 0 : i32
    return %arg0, %c0_i32, %c0_i32_0 : i32, i32, i32
  }
  func.func @transform_3(%arg0: i32, %arg1: i32) -> (i32, i32, i32) {
    %c0_i32 = arith.constant 0 : i32
    %c0_i32_0 = arith.constant 0 : i32
    %c0_i32_1 = arith.constant 0 : i32
    return %arg0, %c0_i32, %c0_i32_0 : i32, i32, i32
  }
  func.func @transform_4(%arg0: i32, %arg1: i32) -> (i32, i32, i32) {
    %c0_i32 = arith.constant 0 : i32
    %c0_i32_0 = arith.constant 0 : i32
    %c0_i32_1 = arith.constant 0 : i32
    return %arg0, %c0_i32, %c0_i32_0 : i32, i32, i32
  }
  func.func @transform_5(%arg0: i32, %arg1: i32) -> (i32, i32, i32) {
    %c0_i32 = arith.constant 0 : i32
    %c0_i32_0 = arith.constant 0 : i32
    %c0_i32_1 = arith.constant 0 : i32
    return %arg0, %c0_i32, %c0_i32_0 : i32, i32, i32
  }
  func.func @transform_6(%arg0: i32, %arg1: i32) -> (i32, i32, i32) {
    %c0_i32 = arith.constant 0 : i32
    %c0_i32_0 = arith.constant 0 : i32
    %c0_i32_1 = arith.constant 0 : i32
    return %arg0, %c0_i32, %c0_i32_0 : i32, i32, i32
  }
  func.func @transform_7(%arg0: i32, %arg1: i32) -> (i32, i32, i32) {
    %c0_i32 = arith.constant 0 : i32
    %c0_i32_0 = arith.constant 0 : i32
    return %arg0, %arg1, %c0_i32 : i32, i32, i32
  }
}

</mosaic_0001>

<llo_original>
// kernel: tpu_custom_call.1
$region0: #{tpu_custom_call.1}
  #allocation0 [shape = 'u32[]', space=smem, size = 0x4, offset = 0x4, fixed_abs, tag = 'smem constant byte address 0x4 - core index']
  #allocation1 [shape = 'u32[144,128]{1,0:T(1,128)}', space=vmem, size = 0x12000, scoped, tag = 'internal scratch']
  %s0 = inlined_call_operand.hbm [shape: f32[2,256], index: 0, kind: input, shape index: {}]
  %s1 = inlined_call_operand.hbm [shape: f32[4,256,256], index: 1, kind: input, shape index: {}]
  %s2 = inlined_call_operand.hbm [shape: f32[4,1,256], index: 2, kind: input, shape index: {}]
  %s3 = inlined_call_operand.hbm [shape: f32[4,256,256], index: 3, kind: input, shape index: {}]
  %s4 = inlined_call_operand.vmem [shape: f32[4,1,256], index: 4, kind: input, shape index: {}]
  %s5 = inlined_call_operand.hbm [shape: f32[4,256,256], index: 5, kind: input, shape index: {}]
  %s6 = inlined_call_operand.vmem [shape: f32[4,1,256], index: 6, kind: input, shape index: {}]
  %s7 = inlined_call_operand.hbm [shape: f32[4,2,256], index: 7, kind: output, shape index: {}]
  %s8 = sld [smem:[#allocation0]]
  $region81: #{tpu_custom_call.1} parent=0
    _
  %s10 = ssub.s32 1, %s8
  %s11 = scalar_select 0, %s10, %s8
  $region1: #{tpu_custom_call.1} parent=0
    #allocation2 [shape = 'u8[2048]{0}', space=vmem, size = 0x800, scoped, tag = 'input window, operand 0, single buffered']
    #allocation3 [shape = 's32[2]{0}', space=sflag, size = 0x8, scoped, tag = 'scoped memory for tpu_custom_call.1']
    #allocation4 [shape = 's32[2]{0}', space=sflag, size = 0x8, scoped, tag = 'scoped memory for tpu_custom_call.1']
    #allocation5 [shape = 'u8[1048576]{0}', space=vmem, size = 0x100000, scoped, tag = 'input window, operand 1']
    #allocation6 [shape = 's32[2]{0}', space=sflag, size = 0x8, scoped, tag = 'scoped memory for tpu_custom_call.1']
    #allocation7 [shape = 'u8[4096]{0}', space=vmem, size = 0x1000, scoped, tag = 'input window, operand 2']
    #allocation8 [shape = 'u8[1048576]{0}', space=vmem, size = 0x100000, scoped, tag = 'input window, operand 3']
    #allocation9 [shape = 's32[2]{0}', space=sflag, size = 0x8, scoped, tag = 'scoped memory for tpu_custom_call.1']
    #allocation10 [shape = 'u8[1048576]{0}', space=vmem, size = 0x100000, scoped, tag = 'input window, operand 5']
    #allocation11 [shape = 'u8[8192]{0}', space=vmem, size = 0x2000, scoped, tag = 'output window, operand 0']
    %12 = vsyncpa [#allocation3], 0
    %13 = vsyncpa [#allocation6], 0
    %s14 = scalar_lea.sflag [#allocation6], 1
    %15 = vsyncpa %s14, 0
    %16 = vsyncpa [#allocation9], 0
    %s17 = scalar_lea.sflag [#allocation9], 1
    %18 = vsyncpa %s17, 0
    %19 = vsyncpa [#allocation4], 0
    %s20 = scalar_lea.sflag [#allocation4], 1
    %21 = vsyncpa %s20, 0
    loop: start=0, step=1, limit=4
    $region2: #{tpu_custom_call.1} parent=1 // loop_pre_header
      _
    $region3: #{tpu_custom_call.1} parent=1 // loop_header
      %s23 = sphi 0, %s27
      %p24 = scmp.ge.s32.totalorder %s23, 4
      %s30 = sphi 0, %s42
      %s31 = sphi 0, %s38
      %s32 = sphi 0, %s30
      %s33 = sphi 0, %s31
      %s34 = sphi 0, %s32
      %s35 = sphi 0, %s33
      %s45 = sphi 0, %s47
      %s48 = sphi 0, %s45
      %s49 = sphi 0, %s48
      %s65 = sphi 0, %s49
      %s71 = sphi 0, %s73
      %s74 = sphi 0, %s71
      %s75 = sphi 0, %s74
      %s91 = sphi 0, %s75
      %s97 = sphi 0, %s99
      %s100 = sphi 0, %s97
      %s101 = sphi 0, %s100
      %s117 = sphi 0, %s101
      %s123 = sphi 0, %s125
      %s126 = sphi 0, %s123
      %s127 = sphi 0, %s126
      %s143 = sphi 0, %s127
      %s149 = sphi 0, %s151
      %s152 = sphi 0, %s149
      %s153 = sphi 0, %s152
      %s169 = sphi 0, %s153
      %s175 = sphi 0, %s177
      %s178 = sphi 0, %s175
      %s179 = sphi 0, %s178
      %s195 = sphi 0, %s179
      %s201 = sphi 0, %s203
      %s204 = sphi 0, %s201
      %s205 = sphi 0, %s204
      %s221 = sphi 0, %s205
      %s229 = sphi 0, %s231
      %s232 = sphi 0, %s229
      %s233 = sphi 0, %s232
      %s249 = sphi 0, %s233
    $region4: #{tpu_custom_call.1} parent=1 // loop_header_branch
      %26 = sbr.rel (%p24) target = $region8
    $region5: #{tpu_custom_call.1} parent=1 // loop_body
      %s28 = ssub.s32 %s23, 1
      %s29 = ssub.s32 %s23, 2
      %s36 = sadd.s32 1, %s31
      %p37 = scmp.ge.s32.totalorder %s36, 1
      %s38 = scalar_select %p37, 0, %s36
      %s39 = sadd.s32 1, %s30
      %s40 = scalar_select %p37, %s39, %s30
      %p41 = scmp.ge.s32.totalorder %s40, 2
      %s42 = scalar_select %p41, 0, %s40
      %s43 = ssub.s32 %s31, %s38
      %p44 = scmp.eq.s32.totalorder %s43, 0
      %s46 = sadd.s32 %s45, 1
      %s47 = scalar_select %p44, %s45, %s46
      %p50 = pneg %p44
      %p51 = scmp.eq.s32.totalorder %s23, 1
      %p52 = por %p50, %p51
      %p53 = scmp.ne.s32.totalorder %s45, %s48
      %p54 = scmp.eq.s32.totalorder %s23, 0
      %p55 = por %p53, %p54
      %p56 = scmp.ne.s32.totalorder %s45, %s48
      %p57 = scmp.eq.s32.totalorder %s28, 1
      %p58 = por %p56, %p57
      %p59 = scmp.ne.s32.totalorder %s48, %s49
      %p60 = scmp.eq.s32.totalorder %s28, 0
      %p61 = por %p59, %p60
      %p62 = scmp.ne.s32.totalorder %s48, %s49
      %p63 = scmp.eq.s32.totalorder %s29, 1
      %p64 = por %p62, %p63
      %p66 = scmp.ne.s32.totalorder %s49, %s65
      %p67 = scmp.eq.s32.totalorder %s29, 0
      %p68 = por %p66, %p67
      %s69 = ssub.s32 %s30, %s42
      %p70 = scmp.eq.s32.totalorder %s69, 0
      %s72 = sadd.s32 %s71, 1
      %s73 = scalar_select %p70, %s71, %s72
      %p76 = pneg %p70
      %p77 = scmp.eq.s32.totalorder %s23, 1
      %p78 = por %p76, %p77
      %p79 = scmp.ne.s32.totalorder %s71, %s74
      %p80 = scmp.eq.s32.totalorder %s23, 0
      %p81 = por %p79, %p80
      %p82 = scmp.ne.s32.totalorder %s71, %s74
      %p83 = scmp.eq.s32.totalorder %s28, 1
      %p84 = por %p82, %p83
      %p85 = scmp.ne.s32.totalorder %s74, %s75
      %p86 = scmp.eq.s32.totalorder %s28, 0
      %p87 = por %p85, %p86
      %p88 = scmp.ne.s32.totalorder %s74, %s75
      %p89 = scmp.eq.s32.totalorder %s29, 1
      %p90 = por %p88, %p89
      %p92 = scmp.ne.s32.totalorder %s75, %s91
      %p93 = scmp.eq.s32.totalorder %s29, 0
      %p94 = por %p92, %p93
      %s95 = ssub.s32 %s30, %s42
      %p96 = scmp.eq.s32.totalorder %s95, 0
      %s98 = sadd.s32 %s97, 1
      %s99 = scalar_select %p96, %s97, %s98
      %p102 = pneg %p96
      %p103 = scmp.eq.s32.totalorder %s23, 1
      %p104 = por %p102, %p103
      %p105 = scmp.ne.s32.totalorder %s97, %s100
      %p106 = scmp.eq.s32.totalorder %s23, 0
      %p107 = por %p105, %p106
      %p108 = scmp.ne.s32.totalorder %s97, %s100
      %p109 = scmp.eq.s32.totalorder %s28, 1
      %p110 = por %p108, %p109
      %p111 = scmp.ne.s32.totalorder %s100, %s101
      %p112 = scmp.eq.s32.totalorder %s28, 0
      %p113 = por %p111, %p112
      %p114 = scmp.ne.s32.totalorder %s100, %s101
      %p115 = scmp.eq.s32.totalorder %s29, 1
      %p116 = por %p114, %p115
      %p118 = scmp.ne.s32.totalorder %s101, %s117
      %p119 = scmp.eq.s32.totalorder %s29, 0
      %p120 = por %p118, %p119
      %s121 = ssub.s32 %s30, %s42
      %p122 = scmp.eq.s32.totalorder %s121, 0
      %s124 = sadd.s32 %s123, 1
      %s125 = scalar_select %p122, %s123, %s124
      %p128 = pneg %p122
      %p129 = scmp.eq.s32.totalorder %s23, 1
      %p130 = por %p128, %p129
      %p131 = scmp.ne.s32.totalorder %s123, %s126
      %p132 = scmp.eq.s32.totalorder %s23, 0
      %p133 = por %p131, %p132
      %p134 = scmp.ne.s32.totalorder %s123, %s126
      %p135 = scmp.eq.s32.totalorder %s28, 1
      %p136 = por %p134, %p135
      %p137 = scmp.ne.s32.totalorder %s126, %s127
      %p138 = scmp.eq.s32.totalorder %s28, 0
      %p139 = por %p137, %p138
      %p140 = scmp.ne.s32.totalorder %s126, %s127
      %p141 = scmp.eq.s32.totalorder %s29, 1
      %p142 = por %p140, %p141
      %p144 = scmp.ne.s32.totalorder %s127, %s143
      %p145 = scmp.eq.s32.totalorder %s29, 0
      %p146 = por %p144, %p145
      %s147 = ssub.s32 %s30, %s42
      %p148 = scmp.eq.s32.totalorder %s147, 0
      %s150 = sadd.s32 %s149, 1
      %s151 = scalar_select %p148, %s149, %s150
      %p154 = pneg %p148
      %p155 = scmp.eq.s32.totalorder %s23, 1
      %p156 = por %p154, %p155
      %p157 = scmp.ne.s32.totalorder %s149, %s152
      %p158 = scmp.eq.s32.totalorder %s23, 0
      %p159 = por %p157, %p158
      %p160 = scmp.ne.s32.totalorder %s149, %s152
      %p161 = scmp.eq.s32.totalorder %s28, 1
      %p162 = por %p160, %p161
      %p163 = scmp.ne.s32.totalorder %s152, %s153
      %p164 = scmp.eq.s32.totalorder %s28, 0
      %p165 = por %p163, %p164
      %p166 = scmp.ne.s32.totalorder %s152, %s153
      %p167 = scmp.eq.s32.totalorder %s29, 1
      %p168 = por %p166, %p167
      %p170 = scmp.ne.s32.totalorder %s153, %s169
      %p171 = scmp.eq.s32.totalorder %s29, 0
      %p172 = por %p170, %p171
      %s173 = ssub.s32 %s30, %s42
      %p174 = scmp.eq.s32.totalorder %s173, 0
      %s176 = sadd.s32 %s175, 1
      %s177 = scalar_select %p174, %s175, %s176
      %p180 = pneg %p174
      %p181 = scmp.eq.s32.totalorder %s23, 1
      %p182 = por %p180, %p181
      %p183 = scmp.ne.s32.totalorder %s175, %s178
      %p184 = scmp.eq.s32.totalorder %s23, 0
      %p185 = por %p183, %p184
      %p186 = scmp.ne.s32.totalorder %s175, %s178
      %p187 = scmp.eq.s32.totalorder %s28, 1
      %p188 = por %p186, %p187
      %p189 = scmp.ne.s32.totalorder %s178, %s179
      %p190 = scmp.eq.s32.totalorder %s28, 0
      %p191 = por %p189, %p190
      %p192 = scmp.ne.s32.totalorder %s178, %s179
      %p193 = scmp.eq.s32.totalorder %s29, 1
      %p194 = por %p192, %p193
      %p196 = scmp.ne.s32.totalorder %s179, %s195
      %p197 = scmp.eq.s32.totalorder %s29, 0
      %p198 = por %p196, %p197
      %s199 = ssub.s32 %s30, %s42
      %p200 = scmp.eq.s32.totalorder %s199, 0
      %s202 = sadd.s32 %s201, 1
      %s203 = scalar_select %p200, %s201, %s202
      %p206 = pneg %p200
      %p207 = scmp.eq.s32.totalorder %s23, 1
      %p208 = por %p206, %p207
      %p209 = scmp.ne.s32.totalorder %s201, %s204
      %p210 = scmp.eq.s32.totalorder %s23, 0
      %p211 = por %p209, %p210
      %p212 = scmp.ne.s32.totalorder %s201, %s204
      %p213 = scmp.eq.s32.totalorder %s28, 1
      %p214 = por %p212, %p213
      %p215 = scmp.ne.s32.totalorder %s204, %s205
      %p216 = scmp.eq.s32.totalorder %s28, 0
      %p217 = por %p215, %p216
      %p218 = scmp.ne.s32.totalorder %s204, %s205
      %p219 = scmp.eq.s32.totalorder %s29, 1
      %p220 = por %p218, %p219
      %p222 = scmp.ne.s32.totalorder %s205, %s221
      %p223 = scmp.eq.s32.totalorder %s29, 0
      %p224 = por %p222, %p223
      %s225 = ssub.s32 %s30, %s42
      %s226 = ssub.s32 %s31, %s38
      %s227 = sor.u32 %s225, %s226
      %p228 = scmp.eq.s32.totalorder %s227, 0
      %s230 = sadd.s32 %s229, 1
      %s231 = scalar_select %p228, %s229, %s230
      %p234 = pneg %p228
      %p235 = scmp.eq.s32.totalorder %s23, 1
      %p236 = por %p234, %p235
      %p237 = scmp.ne.s32.totalorder %s229, %s232
      %p238 = scmp.eq.s32.totalorder %s23, 0
      %p239 = por %p237, %p238
      %p240 = scmp.ne.s32.totalorder %s229, %s232
      %p241 = scmp.eq.s32.totalorder %s28, 1
      %p242 = por %p240, %p241
      %p243 = scmp.ne.s32.totalorder %s232, %s233
      %p244 = scmp.eq.s32.totalorder %s28, 0
      %p245 = por %p243, %p244
      %p246 = scmp.ne.s32.totalorder %s232, %s233
      %p247 = scmp.eq.s32.totalorder %s29, 1
      %p248 = por %p246, %p247
      %p250 = scmp.ne.s32.totalorder %s233, %s249
      %p251 = scmp.eq.s32.totalorder %s29, 0
      %p252 = por %p250, %p251
      %p253 = scmp.le.s32.totalorder 1, %s23
      %p254 = scmp.lt.s32.totalorder %s23, 3
      %p255 = pnand %p253, %p254
      %p256 = pneg %p255
      // Predicated region
      $region9: #{tpu_custom_call.1} parent=5 // pred_check
        _
      $region10: #{tpu_custom_call.1} parent=5 // pred_check_branch
        %258 = sbr.rel (%p255) target = $region12
      $region11: #{tpu_custom_call.1} parent=5 // pred_region
        %s259 = ssub.s32 %s23, 1
        // Predicated region
        $region13: #{tpu_custom_call.1} parent=11 // pred_check
          %p260 = pneg %p61
        $region14: #{tpu_custom_call.1} parent=11 // pred_check_branch
          %262 = sbr.rel (%p260) target = $region16
        $region15: #{tpu_custom_call.1} parent=11 // pred_region
          %s264 = ssub.s32 64, 64
          %265 = vsyncadd [#allocation3], %s264
          %s266 = smul.addr %s33, 2
          %s267 = smul.addr %s266, 32
          %s268 = scalar_lea.hbm %s0, %s267
          %s270 = sshll.u32 [#allocation2], 4
          %s271 = int_to_ptr.vmem [resolvable:$true] %s270
          %273 = dma.hbm_to_vmem [thread:$0]  %s268, 64, %s271, [#allocation3]
        $region16: #{tpu_custom_call.1} parent=11 // pred_fallthru
          _
      $region12: #{tpu_custom_call.1} parent=5 // pred_fallthru
        _
      %p274 = scmp.lt.s32.totalorder %s23, 2
      // Predicated region
      $region17: #{tpu_custom_call.1} parent=5 // pred_check
        %p275 = pneg %p274
      $region18: #{tpu_custom_call.1} parent=5 // pred_check_branch
        %277 = sbr.rel (%p275) target = $region20
      $region19: #{tpu_custom_call.1} parent=5 // pred_region
        // Predicated region
        $region21: #{tpu_custom_call.1} parent=19 // pred_check
          %p278 = pneg %p81
        $region22: #{tpu_custom_call.1} parent=19 // pred_check_branch
          %280 = sbr.rel (%p278) target = $region24
        $region23: #{tpu_custom_call.1} parent=19 // pred_region
          %s281 = sand.u32 %s23, 1
          %s282 = scalar_lea.sflag [#allocation6], %s281
          %s283 = sand.u32 %s71, 1
          %s284 = smul.addr %s283, 1024
          %s285 = scalar_lea.vmem [#allocation5], %s284
          %s286 = smul.u32 2, %s30
          %s288 = ssub.s32 16384, 16384
          %289 = vsyncadd %s282, %s288
          %s290 = smul.addr %s286, 64
          %s291 = smul.addr %s290, 128
          %s292 = scalar_lea.hbm %s1, %s291
          %s293 = sshll.u32 %s285, 4
          %s294 = int_to_ptr.vmem [resolvable:$true] %s293
          %299 = dma.hbm_to_vmem [thread:$0]  %s292, 16384, %s294, %s282, 256, 256, 16
        $region24: #{tpu_custom_call.1} parent=19 // pred_fallthru
          _
        // Predicated region
        $region25: #{tpu_custom_call.1} parent=19 // pred_check
          %p300 = pneg %p107
        $region26: #{tpu_custom_call.1} parent=19 // pred_check_branch
          %302 = sbr.rel (%p300) target = $region28
        $region27: #{tpu_custom_call.1} parent=19 // pred_region
          %s303 = sand.u32 %s23, 1
          %s304 = scalar_lea.sflag [#allocation6], %s303
          %s305 = sand.u32 %s97, 1
          %s306 = smul.addr %s305, 4
          %s307 = scalar_lea.vmem [#allocation7], %s306
          %s308 = smul.u32 2, %s30
          %s310 = ssub.s32 64, 64
          %311 = vsyncadd %s304, %s310
          %s312 = smul.addr %s308, 2
          %s313 = smul.addr %s312, 16
          %s314 = scalar_lea.hbm %s2, %s313
          %s315 = sshll.u32 %s307, 4
          %s316 = int_to_ptr.vmem [resolvable:$true] %s315
          %321 = dma.hbm_to_vmem [thread:$0]  %s314, 64, %s316, %s304, 32, 32, 2
        $region28: #{tpu_custom_call.1} parent=19 // pred_fallthru
          _
        // Predicated region
        $region29: #{tpu_custom_call.1} parent=19 // pred_check
          %p322 = pneg %p133
        $region30: #{tpu_custom_call.1} parent=19 // pred_check_branch
          %324 = sbr.rel (%p322) target = $region32
        $region31: #{tpu_custom_call.1} parent=19 // pred_region
          %s325 = sand.u32 %s23, 1
          %s326 = scalar_lea.sflag [#allocation9], %s325
          %s327 = sand.u32 %s123, 1
          %s328 = smul.addr %s327, 1024
          %s329 = scalar_lea.vmem [#allocation8], %s328
          %s330 = smul.u32 2, %s30
          %s332 = ssub.s32 16384, 16384
          %333 = vsyncadd %s326, %s332
          %s334 = smul.addr %s330, 64
          %s335 = smul.addr %s334, 128
          %s336 = scalar_lea.hbm %s3, %s335
          %s337 = sshll.u32 %s329, 4
          %s338 = int_to_ptr.vmem [resolvable:$true] %s337
          %343 = dma.hbm_to_vmem [thread:$0]  %s336, 16384, %s338, %s326, 256, 256, 16
        $region32: #{tpu_custom_call.1} parent=19 // pred_fallthru
          _
        // Predicated region
        $region33: #{tpu_custom_call.1} parent=19 // pred_check
          %p344 = pneg %p159
        $region34: #{tpu_custom_call.1} parent=19 // pred_check_branch
          %346 = sbr.rel (%p344) target = $region36
        $region35: #{tpu_custom_call.1} parent=19 // pred_region
          %s347 = smul.u32 2, %s30
          %p348 = scmp.lt.s32.totalorder %s347, 3
          %s349 = scalar_select %p348, %s347, 3
          %s350 = smul.addr %s349, 2
          %s351 = scalar_lea.vmem %s4, %s350
          %s352 = smul.u32 2, %s30
        $region36: #{tpu_custom_call.1} parent=19 // pred_fallthru
          _
        // Predicated region
        $region37: #{tpu_custom_call.1} parent=19 // pred_check
          %p353 = pneg %p185
        $region38: #{tpu_custom_call.1} parent=19 // pred_check_branch
          %355 = sbr.rel (%p353) target = $region40
        $region39: #{tpu_custom_call.1} parent=19 // pred_region
          %s356 = sand.u32 %s23, 1
          %s357 = scalar_lea.sflag [#allocation9], %s356
          %s358 = sand.u32 %s175, 1
          %s359 = smul.addr %s358, 1024
          %s360 = scalar_lea.vmem [#allocation10], %s359
          %s361 = smul.u32 2, %s30
          %s363 = ssub.s32 16384, 16384
          %364 = vsyncadd %s357, %s363
          %s365 = smul.addr %s361, 64
          %s366 = smul.addr %s365, 128
          %s367 = scalar_lea.hbm %s5, %s366
          %s368 = sshll.u32 %s360, 4
          %s369 = int_to_ptr.vmem [resolvable:$true] %s368
          %374 = dma.hbm_to_vmem [thread:$0]  %s367, 16384, %s369, %s357, 256, 256, 16
        $region40: #{tpu_custom_call.1} parent=19 // pred_fallthru
          _
        // Predicated region
        $region41: #{tpu_custom_call.1} parent=19 // pred_check
          %p375 = pneg %p211
        $region42: #{tpu_custom_call.1} parent=19 // pred_check_branch
          %377 = sbr.rel (%p375) target = $region44
        $region43: #{tpu_custom_call.1} parent=19 // pred_region
          %s378 = smul.u32 2, %s30
          %p379 = scmp.lt.s32.totalorder %s378, 3
          %s380 = scalar_select %p379, %s378, 3
          %s381 = smul.addr %s380, 2
          %s382 = scalar_lea.vmem %s6, %s381
          %s383 = smul.u32 2, %s30
        $region44: #{tpu_custom_call.1} parent=19 // pred_fallthru
          _
      $region20: #{tpu_custom_call.1} parent=5 // pred_fallthru
        _
      %p384 = scmp.le.s32.totalorder 1, %s23
      %p385 = scmp.lt.s32.totalorder %s23, 3
      %p386 = pnand %p384, %p385
      %p387 = pneg %p386
      // Predicated region
      $region45: #{tpu_custom_call.1} parent=5 // pred_check
        _
      $region46: #{tpu_custom_call.1} parent=5 // pred_check_branch
        %389 = sbr.rel (%p386) target = $region48
      $region47: #{tpu_custom_call.1} parent=5 // pred_region
        %s390 = ssub.s32 %s23, 1
        // Predicated region
        $region49: #{tpu_custom_call.1} parent=47 // pred_check
          %p391 = pneg %p61
        $region50: #{tpu_custom_call.1} parent=47 // pred_check_branch
          %393 = sbr.rel (%p391) target = $region52
        $region51: #{tpu_custom_call.1} parent=47 // pred_region
          %394 = dma.done [#allocation3], 64
        $region52: #{tpu_custom_call.1} parent=47 // pred_fallthru
          _
        %s395 = sand.u32 %s28, 1
        %s396 = scalar_lea.sflag [#allocation6], %s395
        %s397 = sand.u32 %s74, 1
        %s398 = smul.addr %s397, 1024
        %s399 = scalar_lea.vmem [#allocation5], %s398
        // Predicated region
        $region53: #{tpu_custom_call.1} parent=47 // pred_check
          %p400 = pneg %p87
        $region54: #{tpu_custom_call.1} parent=47 // pred_check_branch
          %402 = sbr.rel (%p400) target = $region56
        $region55: #{tpu_custom_call.1} parent=47 // pred_region
          %403 = dma.done %s396, 16384
        $region56: #{tpu_custom_call.1} parent=47 // pred_fallthru
          _
        %s404 = sand.u32 %s28, 1
        %s405 = scalar_lea.sflag [#allocation6], %s404
        %s406 = sand.u32 %s100, 1
        %s407 = smul.addr %s406, 4
        %s408 = scalar_lea.vmem [#allocation7], %s407
        // Predicated region
        $region57: #{tpu_custom_call.1} parent=47 // pred_check
          %p409 = pneg %p113
        $region58: #{tpu_custom_call.1} parent=47 // pred_check_branch
          %411 = sbr.rel (%p409) target = $region60
        $region59: #{tpu_custom_call.1} parent=47 // pred_region
          %412 = dma.done %s405, 64
        $region60: #{tpu_custom_call.1} parent=47 // pred_fallthru
          _
        %s413 = sand.u32 %s28, 1
        %s414 = scalar_lea.sflag [#allocation9], %s413
        %s415 = sand.u32 %s126, 1
        %s416 = smul.addr %s415, 1024
        %s417 = scalar_lea.vmem [#allocation8], %s416
        // Predicated region
        $region61: #{tpu_custom_call.1} parent=47 // pred_check
          %p418 = pneg %p139
        $region62: #{tpu_custom_call.1} parent=47 // pred_check_branch
          %420 = sbr.rel (%p418) target = $region64
        $region63: #{tpu_custom_call.1} parent=47 // pred_region
          %421 = dma.done %s414, 16384
        $region64: #{tpu_custom_call.1} parent=47 // pred_fallthru
          _
        %s422 = sand.u32 %s28, 1
        %s423 = scalar_lea.sflag [#allocation9], %s422
        %s424 = sand.u32 %s178, 1
        %s425 = smul.addr %s424, 1024
        %s426 = scalar_lea.vmem [#allocation10], %s425
        // Predicated region
        $region65: #{tpu_custom_call.1} parent=47 // pred_check
          %p427 = pneg %p191
        $region66: #{tpu_custom_call.1} parent=47 // pred_check_branch
          %429 = sbr.rel (%p427) target = $region68
        $region67: #{tpu_custom_call.1} parent=47 // pred_region
          %430 = dma.done %s423, 16384
        $region68: #{tpu_custom_call.1} parent=47 // pred_fallthru
          _
        %p431 = pneg %p61
        %p432 = pneg %p58
        %s433 = sand.u32 %s28, 1
        %s434 = scalar_lea.sflag [#allocation6], %s433
        %s435 = sand.u32 %s74, 1
        %s436 = smul.addr %s435, 1024
        %s437 = scalar_lea.vmem [#allocation5], %s436
        %p438 = pneg %p87
        %p439 = pneg %p84
        %s440 = sand.u32 %s28, 1
        %s441 = scalar_lea.sflag [#allocation6], %s440
        %s442 = sand.u32 %s100, 1
        %s443 = smul.addr %s442, 4
        %s444 = scalar_lea.vmem [#allocation7], %s443
        %p445 = pneg %p113
        %p446 = pneg %p110
        %s447 = sand.u32 %s28, 1
        %s448 = scalar_lea.sflag [#allocation9], %s447
        %s449 = sand.u32 %s126, 1
        %s450 = smul.addr %s449, 1024
        %s451 = scalar_lea.vmem [#allocation8], %s450
        %p452 = pneg %p139
        %p453 = pneg %p136
        %s454 = smul.u32 2, %s32
        %p455 = scmp.lt.s32.totalorder %s454, 3
        %s456 = scalar_select %p455, %s454, 3
        %s457 = smul.addr %s456, 2
        %s458 = scalar_lea.vmem %s4, %s457
        %p459 = pneg %p165
        %p460 = pneg %p162
        %s461 = sand.u32 %s28, 1
        %s462 = scalar_lea.sflag [#allocation9], %s461
        %s463 = sand.u32 %s178, 1
        %s464 = smul.addr %s463, 1024
        %s465 = scalar_lea.vmem [#allocation10], %s464
        %p466 = pneg %p191
        %p467 = pneg %p188
        %s468 = smul.u32 2, %s32
        %p469 = scmp.lt.s32.totalorder %s468, 3
        %s470 = scalar_select %p469, %s468, 3
        %s471 = smul.addr %s470, 2
        %s472 = scalar_lea.vmem %s6, %s471
        %p473 = pneg %p217
        %p474 = pneg %p214
        %p475 = pneg %p245
        %p476 = pneg %p242
        %s477 = sand.u32 %s232, 1
        %s478 = scalar_lea.sflag [#allocation4], %s477
        %s479 = sand.u32 %s232, 1
        %s480 = smul.addr %s479, 8
        %s481 = scalar_lea.vmem [#allocation11], %s480
        %s482 = smul.u32 2, %s32
        %s483 = smul.u32 2, %s32
        %s484 = smul.u32 2, %s32
        %s485 = smul.u32 2, %s32
        %p486 = scmp.lt.s32.totalorder %s485, 3
        %s487 = scalar_select %p486, %s485, 3
        %s488 = smul.addr %s487, 2
        %s489 = scalar_lea.vmem %s4, %s488
        %s490 = smul.u32 2, %s32
        %s491 = smul.u32 2, %s32
        %s492 = smul.u32 2, %s32
        %p493 = scmp.lt.s32.totalorder %s492, 3
        %s494 = scalar_select %p493, %s492, 3
        %s495 = smul.addr %s494, 2
        %s496 = scalar_lea.vmem %s6, %s495
        %s497 = smul.u32 2, %s32
        %s498 = smul.u32 2, %s32
        %v499 = vld [vmem:[#allocation2] sm:$0xf]
        %v500 = vld [vmem:[%s399] sm:$0xff]
        %v501 = vld [vmem:[%s399 + $0x8] sm:$0xff]
        %v502 = vld [vmem:[%s399 + $0x10] sm:$0xff]
        %v503 = vld [vmem:[%s399 + $0x18] sm:$0xff]
        %v504 = vld [vmem:[%s399 + $0x20] sm:$0xff]
        %v505 = vld [vmem:[%s399 + $0x28] sm:$0xff]
        %v506 = vld [vmem:[%s399 + $0x30] sm:$0xff]
        %v507 = vld [vmem:[%s399 + $0x38] sm:$0xff]
        %v508 = vld [vmem:[%s399 + $0x40] sm:$0xff]
        %v509 = vld [vmem:[%s399 + $0x48] sm:$0xff]
        %v510 = vld [vmem:[%s399 + $0x50] sm:$0xff]
        %v511 = vld [vmem:[%s399 + $0x58] sm:$0xff]
        %v512 = vld [vmem:[%s399 + $0x60] sm:$0xff]
        %v513 = vld [vmem:[%s399 + $0x68] sm:$0xff]
        %v514 = vld [vmem:[%s399 + $0x70] sm:$0xff]
        %v515 = vld [vmem:[%s399 + $0x78] sm:$0xff]
        %v516 = vld [vmem:[%s399 + $0x80] sm:$0xff]
        %v517 = vld [vmem:[%s399 + $0x88] sm:$0xff]
        %v518 = vld [vmem:[%s399 + $0x90] sm:$0xff]
        %v519 = vld [vmem:[%s399 + $0x98] sm:$0xff]
        %v520 = vld [vmem:[%s399 + $0xa0] sm:$0xff]
        %v521 = vld [vmem:[%s399 + $0xa8] sm:$0xff]
        %v522 = vld [vmem:[%s399 + $0xb0] sm:$0xff]
        %v523 = vld [vmem:[%s399 + $0xb8] sm:$0xff]
        %v524 = vld [vmem:[%s399 + $0xc0] sm:$0xff]
        %v525 = vld [vmem:[%s399 + $0xc8] sm:$0xff]
        %v526 = vld [vmem:[%s399 + $0xd0] sm:$0xff]
        %v527 = vld [vmem:[%s399 + $0xd8] sm:$0xff]
        %v528 = vld [vmem:[%s399 + $0xe0] sm:$0xff]
        %v529 = vld [vmem:[%s399 + $0xe8] sm:$0xff]
        %v530 = vld [vmem:[%s399 + $0xf0] sm:$0xff]
        %v531 = vld [vmem:[%s399 + $0xf8] sm:$0xff]
        %v532 = vld [vmem:[%s399 + $0x100] sm:$0xff]
        %v533 = vld [vmem:[%s399 + $0x108] sm:$0xff]
        %v534 = vld [vmem:[%s399 + $0x110] sm:$0xff]
        %v535 = vld [vmem:[%s399 + $0x118] sm:$0xff]
        %v536 = vld [vmem:[%s399 + $0x120] sm:$0xff]
        %v537 = vld [vmem:[%s399 + $0x128] sm:$0xff]
        %v538 = vld [vmem:[%s399 + $0x130] sm:$0xff]
        %v539 = vld [vmem:[%s399 + $0x138] sm:$0xff]
        %v540 = vld [vmem:[%s399 + $0x140] sm:$0xff]
        %v541 = vld [vmem:[%s399 + $0x148] sm:$0xff]
        %v542 = vld [vmem:[%s399 + $0x150] sm:$0xff]
        %v543 = vld [vmem:[%s399 + $0x158] sm:$0xff]
        %v544 = vld [vmem:[%s399 + $0x160] sm:$0xff]
        %v545 = vld [vmem:[%s399 + $0x168] sm:$0xff]
        %v546 = vld [vmem:[%s399 + $0x170] sm:$0xff]
        %v547 = vld [vmem:[%s399 + $0x178] sm:$0xff]
        %v548 = vld [vmem:[%s399 + $0x180] sm:$0xff]
        %v549 = vld [vmem:[%s399 + $0x188] sm:$0xff]
        %v550 = vld [vmem:[%s399 + $0x190] sm:$0xff]
        %v551 = vld [vmem:[%s399 + $0x198] sm:$0xff]
        %v552 = vld [vmem:[%s399 + $0x1a0] sm:$0xff]
        %v553 = vld [vmem:[%s399 + $0x1a8] sm:$0xff]
        %v554 = vld [vmem:[%s399 + $0x1b0] sm:$0xff]
        %v555 = vld [vmem:[%s399 + $0x1b8] sm:$0xff]
        %v556 = vld [vmem:[%s399 + $0x1c0] sm:$0xff]
        %v557 = vld [vmem:[%s399 + $0x1c8] sm:$0xff]
        %v558 = vld [vmem:[%s399 + $0x1d0] sm:$0xff]
        %v559 = vld [vmem:[%s399 + $0x1d8] sm:$0xff]
        %v560 = vld [vmem:[%s399 + $0x1e0] sm:$0xff]
        %v561 = vld [vmem:[%s399 + $0x1e8] sm:$0xff]
        %v562 = vld [vmem:[%s399 + $0x1f0] sm:$0xff]
        %v563 = vld [vmem:[%s399 + $0x1f8] sm:$0xff]
        %v564 = vld [vmem:[%s408] sm:$0x3]
        %v566 = vlaneseq
        %v567 = vshrl.u32 %v566, 7
        %v568 = vsub.s32 0, %v567
        %v569 = vrot.slane %v564, %v568
        %v570 = vlaneseq
        %v571 = vshrl.u32 %v570, 7
        %v572 = vsub.s32 1, %v571
        %v573 = vrot.slane %v564, %v572
        %v578 = vunpack.c.l.s4 1983009808
        %v579 = vunpack.c.0.s8 %v578
        %v580 = vlaneseq
        %v581 = vshrl.u32 %v580, 7
        %v582 = vsub.s32 %v579, %v581
        %v583 = vrot.slane %v499, %v582
        %v584 = vcombine.high %v583, %v583
        %587 = vmatprep.subr.mxu0 %v501
        %588 = vmatpush1.msra.mxu0 %v500
        %589 = vmatprep.subr.mxu0 %v503
        %590 = vmatpush1.msra.mxu0 %v502
        %591 = vmatprep.subr.mxu0 %v505
        %592 = vmatpush1.msra.mxu0 %v504
        %593 = vmatprep.subr.mxu0 %v507
        %594 = vmatpush1.msra.mxu0 %v506
        %595 = vmatprep.subr.mxu0 %v509
        %596 = vmatpush1.msra.mxu0 %v508
        %597 = vmatprep.subr.mxu0 %v511
        %598 = vmatpush1.msra.mxu0 %v510
        %599 = vmatprep.subr.mxu0 %v513
        %600 = vmatpush1.msra.mxu0 %v512
        %601 = vmatprep.subr.mxu0 %v515
        %602 = vmatpush1.msra.mxu0 %v514
        %603 = vmatprep.subr.mxu0 %v517
        %604 = vmatpush1.msra.mxu0 %v516
        %605 = vmatprep.subr.mxu0 %v519
        %606 = vmatpush1.msra.mxu0 %v518
        %607 = vmatprep.subr.mxu0 %v521
        %608 = vmatpush1.msra.mxu0 %v520
        %609 = vmatprep.subr.mxu0 %v523
        %610 = vmatpush1.msra.mxu0 %v522
        %611 = vmatprep.subr.mxu0 %v525
        %612 = vmatpush1.msra.mxu0 %v524
        %613 = vmatprep.subr.mxu0 %v527
        %614 = vmatpush1.msra.mxu0 %v526
        %615 = vmatprep.subr.mxu0 %v529
        %616 = vmatpush1.msra.mxu0 %v528
        %617 = vmatprep.subr.mxu0 %v531
        %618 = vmatpush1.msra.mxu0 %v530
        %619 = vmatprep.subr.mxu0 %v533
        %620 = vmatpush1.msra.mxu0 %v532
        %621 = vmatprep.subr.mxu0 %v535
        %622 = vmatpush1.msra.mxu0 %v534
        %623 = vmatprep.subr.mxu0 %v537
        %624 = vmatpush1.msra.mxu0 %v536
        %625 = vmatprep.subr.mxu0 %v539
        %626 = vmatpush1.msra.mxu0 %v538
        %627 = vmatprep.subr.mxu0 %v541
        %628 = vmatpush1.msra.mxu0 %v540
        %629 = vmatprep.subr.mxu0 %v543
        %630 = vmatpush1.msra.mxu0 %v542
        %631 = vmatprep.subr.mxu0 %v545
        %632 = vmatpush1.msra.mxu0 %v544
        %633 = vmatprep.subr.mxu0 %v547
        %634 = vmatpush1.msra.mxu0 %v546
        %635 = vmatprep.subr.mxu0 %v549
        %636 = vmatpush1.msra.mxu0 %v548
        %637 = vmatprep.subr.mxu0 %v551
        %638 = vmatpush1.msra.mxu0 %v550
        %639 = vmatprep.subr.mxu0 %v553
        %640 = vmatpush1.msra.mxu0 %v552
        %641 = vmatprep.subr.mxu0 %v555
        %642 = vmatpush1.msra.mxu0 %v554
        %643 = vmatprep.subr.mxu0 %v557
        %644 = vmatpush1.msra.mxu0 %v556
        %645 = vmatprep.subr.mxu0 %v559
        %646 = vmatpush1.msra.mxu0 %v558
        %647 = vmatprep.subr.mxu0 %v561
        %648 = vmatpush1.msra.mxu0 %v560
        %649 = vmatprep.subr.mxu0 %v563
        %650 = vmatpush1.msra.mxu0 %v562
        %651 = vmatprep.mubr.f32.mxu0 %v584
        %652 = vmatmul.mubr.f32.gmra.mrb[0].mxu0 %v583
        %v653 = vpop.f32.mrb[0].mxu0
        %v654 = vadd.f32 %v569, %v653
        %v655 = vpop.f32.mrb[0].mxu0
        %v656 = vadd.f32 %v573, %v655
        %657 = vdwg.mxu0
        %v658 = vmax.f32 %v654, 0.0
        %v659 = vmax.f32 %v656, 0.0
        %v660 = vld [vmem:[%s417] sm:$0xff]
        %v661 = vld [vmem:[%s417 + $0x8] sm:$0xff]
        %v662 = vld [vmem:[%s417 + $0x10] sm:$0xff]
        %v663 = vld [vmem:[%s417 + $0x18] sm:$0xff]
        %v664 = vld [vmem:[%s417 + $0x20] sm:$0xff]
        %v665 = vld [vmem:[%s417 + $0x28] sm:$0xff]
        %v666 = vld [vmem:[%s417 + $0x30] sm:$0xff]
        %v667 = vld [vmem:[%s417 + $0x38] sm:$0xff]
        %v668 = vld [vmem:[%s417 + $0x40] sm:$0xff]
        %v669 = vld [vmem:[%s417 + $0x48] sm:$0xff]
        %v670 = vld [vmem:[%s417 + $0x50] sm:$0xff]
        %v671 = vld [vmem:[%s417 + $0x58] sm:$0xff]
        %v672 = vld [vmem:[%s417 + $0x60] sm:$0xff]
        %v673 = vld [vmem:[%s417 + $0x68] sm:$0xff]
        %v674 = vld [vmem:[%s417 + $0x70] sm:$0xff]
        %v675 = vld [vmem:[%s417 + $0x78] sm:$0xff]
        %v676 = vld [vmem:[%s417 + $0x80] sm:$0xff]
        %v677 = vld [vmem:[%s417 + $0x88] sm:$0xff]
        %v678 = vld [vmem:[%s417 + $0x90] sm:$0xff]
        %v679 = vld [vmem:[%s417 + $0x98] sm:$0xff]
        %v680 = vld [vmem:[%s417 + $0xa0] sm:$0xff]
        %v681 = vld [vmem:[%s417 + $0xa8] sm:$0xff]
        %v682 = vld [vmem:[%s417 + $0xb0] sm:$0xff]
        %v683 = vld [vmem:[%s417 + $0xb8] sm:$0xff]
        %v684 = vld [vmem:[%s417 + $0xc0] sm:$0xff]
        %v685 = vld [vmem:[%s417 + $0xc8] sm:$0xff]
        %v686 = vld [vmem:[%s417 + $0xd0] sm:$0xff]
        %v687 = vld [vmem:[%s417 + $0xd8] sm:$0xff]
        %v688 = vld [vmem:[%s417 + $0xe0] sm:$0xff]
        %v689 = vld [vmem:[%s417 + $0xe8] sm:$0xff]
        %v690 = vld [vmem:[%s417 + $0xf0] sm:$0xff]
        %v691 = vld [vmem:[%s417 + $0xf8] sm:$0xff]
        %v692 = vld [vmem:[%s417 + $0x100] sm:$0xff]
        %v693 = vld [vmem:[%s417 + $0x108] sm:$0xff]
        %v694 = vld [vmem:[%s417 + $0x110] sm:$0xff]
        %v695 = vld [vmem:[%s417 + $0x118] sm:$0xff]
        %v696 = vld [vmem:[%s417 + $0x120] sm:$0xff]
        %v697 = vld [vmem:[%s417 + $0x128] sm:$0xff]
        %v698 = vld [vmem:[%s417 + $0x130] sm:$0xff]
        %v699 = vld [vmem:[%s417 + $0x138] sm:$0xff]
        %v700 = vld [vmem:[%s417 + $0x140] sm:$0xff]
        %v701 = vld [vmem:[%s417 + $0x148] sm:$0xff]
        %v702 = vld [vmem:[%s417 + $0x150] sm:$0xff]
        %v703 = vld [vmem:[%s417 + $0x158] sm:$0xff]
        %v704 = vld [vmem:[%s417 + $0x160] sm:$0xff]
        %v705 = vld [vmem:[%s417 + $0x168] sm:$0xff]
        %v706 = vld [vmem:[%s417 + $0x170] sm:$0xff]
        %v707 = vld [vmem:[%s417 + $0x178] sm:$0xff]
        %v708 = vld [vmem:[%s417 + $0x180] sm:$0xff]
        %v709 = vld [vmem:[%s417 + $0x188] sm:$0xff]
        %v710 = vld [vmem:[%s417 + $0x190] sm:$0xff]
        %v711 = vld [vmem:[%s417 + $0x198] sm:$0xff]
        %v712 = vld [vmem:[%s417 + $0x1a0] sm:$0xff]
        %v713 = vld [vmem:[%s417 + $0x1a8] sm:$0xff]
        %v714 = vld [vmem:[%s417 + $0x1b0] sm:$0xff]
        %v715 = vld [vmem:[%s417 + $0x1b8] sm:$0xff]
        %v716 = vld [vmem:[%s417 + $0x1c0] sm:$0xff]
        %v717 = vld [vmem:[%s417 + $0x1c8] sm:$0xff]
        %v718 = vld [vmem:[%s417 + $0x1d0] sm:$0xff]
        %v719 = vld [vmem:[%s417 + $0x1d8] sm:$0xff]
        %v720 = vld [vmem:[%s417 + $0x1e0] sm:$0xff]
        %v721 = vld [vmem:[%s417 + $0x1e8] sm:$0xff]
        %v722 = vld [vmem:[%s417 + $0x1f0] sm:$0xff]
        %v723 = vld [vmem:[%s417 + $0x1f8] sm:$0xff]
        %v724 = vld [vmem:[%s489] sm:$0x3]
        %v726 = vlaneseq
        %v727 = vshrl.u32 %v726, 7
        %v728 = vsub.s32 0, %v727
        %v729 = vrot.slane %v724, %v728
        %v730 = vlaneseq
        %v731 = vshrl.u32 %v730, 7
        %v732 = vsub.s32 1, %v731
        %v733 = vrot.slane %v724, %v732
        %736 = vmatprep.subr.mxu0 %v661
        %737 = vmatpush1.msra.mxu0 %v660
        %738 = vmatprep.subr.mxu0 %v663
        %739 = vmatpush1.msra.mxu0 %v662
        %740 = vmatprep.subr.mxu0 %v665
        %741 = vmatpush1.msra.mxu0 %v664
        %742 = vmatprep.subr.mxu0 %v667
        %743 = vmatpush1.msra.mxu0 %v666
        %744 = vmatprep.subr.mxu0 %v669
        %745 = vmatpush1.msra.mxu0 %v668
        %746 = vmatprep.subr.mxu0 %v671
        %747 = vmatpush1.msra.mxu0 %v670
        %748 = vmatprep.subr.mxu0 %v673
        %749 = vmatpush1.msra.mxu0 %v672
        %750 = vmatprep.subr.mxu0 %v675
        %751 = vmatpush1.msra.mxu0 %v674
        %752 = vmatprep.subr.mxu0 %v677
        %753 = vmatpush1.msra.mxu0 %v676
        %754 = vmatprep.subr.mxu0 %v679
        %755 = vmatpush1.msra.mxu0 %v678
        %756 = vmatprep.subr.mxu0 %v681
        %757 = vmatpush1.msra.mxu0 %v680
        %758 = vmatprep.subr.mxu0 %v683
        %759 = vmatpush1.msra.mxu0 %v682
        %760 = vmatprep.subr.mxu0 %v685
        %761 = vmatpush1.msra.mxu0 %v684
        %762 = vmatprep.subr.mxu0 %v687
        %763 = vmatpush1.msra.mxu0 %v686
        %764 = vmatprep.subr.mxu0 %v689
        %765 = vmatpush1.msra.mxu0 %v688
        %766 = vmatprep.subr.mxu0 %v691
        %767 = vmatpush1.msra.mxu0 %v690
        %768 = vmatprep.subr.mxu0 %v693
        %769 = vmatpush1.msra.mxu0 %v692
        %770 = vmatprep.subr.mxu0 %v695
        %771 = vmatpush1.msra.mxu0 %v694
        %772 = vmatprep.subr.mxu0 %v697
        %773 = vmatpush1.msra.mxu0 %v696
        %774 = vmatprep.subr.mxu0 %v699
        %775 = vmatpush1.msra.mxu0 %v698
        %776 = vmatprep.subr.mxu0 %v701
        %777 = vmatpush1.msra.mxu0 %v700
        %778 = vmatprep.subr.mxu0 %v703
        %779 = vmatpush1.msra.mxu0 %v702
        %780 = vmatprep.subr.mxu0 %v705
        %781 = vmatpush1.msra.mxu0 %v704
        %782 = vmatprep.subr.mxu0 %v707
        %783 = vmatpush1.msra.mxu0 %v706
        %784 = vmatprep.subr.mxu0 %v709
        %785 = vmatpush1.msra.mxu0 %v708
        %786 = vmatprep.subr.mxu0 %v711
        %787 = vmatpush1.msra.mxu0 %v710
        %788 = vmatprep.subr.mxu0 %v713
        %789 = vmatpush1.msra.mxu0 %v712
        %790 = vmatprep.subr.mxu0 %v715
        %791 = vmatpush1.msra.mxu0 %v714
        %792 = vmatprep.subr.mxu0 %v717
        %793 = vmatpush1.msra.mxu0 %v716
        %794 = vmatprep.subr.mxu0 %v719
        %795 = vmatpush1.msra.mxu0 %v718
        %796 = vmatprep.subr.mxu0 %v721
        %797 = vmatpush1.msra.mxu0 %v720
        %798 = vmatprep.subr.mxu0 %v723
        %799 = vmatpush1.msra.mxu0 %v722
        %800 = vmatprep.mubr.f32.mxu0 %v659
        %801 = vmatmul.mubr.f32.gmra.mrb[0].mxu0 %v658
        %v802 = vpop.f32.mrb[0].mxu0
        %v803 = vadd.f32 %v729, %v802
        %v804 = vpop.f32.mrb[0].mxu0
        %v805 = vadd.f32 %v733, %v804
        %806 = vdwg.mxu0
        %v807 = vmax.f32 %v803, 0.0
        %v808 = vmax.f32 %v805, 0.0
        %v809 = vadd.f32 %v807, %v583
        %v810 = vadd.f32 %v808, %v584
        %v811 = vld [vmem:[%s426] sm:$0xff]
        %v812 = vld [vmem:[%s426 + $0x8] sm:$0xff]
        %v813 = vld [vmem:[%s426 + $0x10] sm:$0xff]
        %v814 = vld [vmem:[%s426 + $0x18] sm:$0xff]
        %v815 = vld [vmem:[%s426 + $0x20] sm:$0xff]
        %v816 = vld [vmem:[%s426 + $0x28] sm:$0xff]
        %v817 = vld [vmem:[%s426 + $0x30] sm:$0xff]
        %v818 = vld [vmem:[%s426 + $0x38] sm:$0xff]
        %v819 = vld [vmem:[%s426 + $0x40] sm:$0xff]
        %v820 = vld [vmem:[%s426 + $0x48] sm:$0xff]
        %v821 = vld [vmem:[%s426 + $0x50] sm:$0xff]
        %v822 = vld [vmem:[%s426 + $0x58] sm:$0xff]
        %v823 = vld [vmem:[%s426 + $0x60] sm:$0xff]
        %v824 = vld [vmem:[%s426 + $0x68] sm:$0xff]
        %v825 = vld [vmem:[%s426 + $0x70] sm:$0xff]
        %v826 = vld [vmem:[%s426 + $0x78] sm:$0xff]
        %v827 = vld [vmem:[%s426 + $0x80] sm:$0xff]
        %v828 = vld [vmem:[%s426 + $0x88] sm:$0xff]
        %v829 = vld [vmem:[%s426 + $0x90] sm:$0xff]
        %v830 = vld [vmem:[%s426 + $0x98] sm:$0xff]
        %v831 = vld [vmem:[%s426 + $0xa0] sm:$0xff]
        %v832 = vld [vmem:[%s426 + $0xa8] sm:$0xff]
        %v833 = vld [vmem:[%s426 + $0xb0] sm:$0xff]
        %v834 = vld [vmem:[%s426 + $0xb8] sm:$0xff]
        %v835 = vld [vmem:[%s426 + $0xc0] sm:$0xff]
        %v836 = vld [vmem:[%s426 + $0xc8] sm:$0xff]
        %v837 = vld [vmem:[%s426 + $0xd0] sm:$0xff]
        %v838 = vld [vmem:[%s426 + $0xd8] sm:$0xff]
        %v839 = vld [vmem:[%s426 + $0xe0] sm:$0xff]
        %v840 = vld [vmem:[%s426 + $0xe8] sm:$0xff]
        %v841 = vld [vmem:[%s426 + $0xf0] sm:$0xff]
        %v842 = vld [vmem:[%s426 + $0xf8] sm:$0xff]
        %v843 = vld [vmem:[%s426 + $0x100] sm:$0xff]
        %v844 = vld [vmem:[%s426 + $0x108] sm:$0xff]
        %v845 = vld [vmem:[%s426 + $0x110] sm:$0xff]
        %v846 = vld [vmem:[%s426 + $0x118] sm:$0xff]
        %v847 = vld [vmem:[%s426 + $0x120] sm:$0xff]
        %v848 = vld [vmem:[%s426 + $0x128] sm:$0xff]
        %v849 = vld [vmem:[%s426 + $0x130] sm:$0xff]
        %v850 = vld [vmem:[%s426 + $0x138] sm:$0xff]
        %v851 = vld [vmem:[%s426 + $0x140] sm:$0xff]
        %v852 = vld [vmem:[%s426 + $0x148] sm:$0xff]
        %v853 = vld [vmem:[%s426 + $0x150] sm:$0xff]
        %v854 = vld [vmem:[%s426 + $0x158] sm:$0xff]
        %v855 = vld [vmem:[%s426 + $0x160] sm:$0xff]
        %v856 = vld [vmem:[%s426 + $0x168] sm:$0xff]
        %v857 = vld [vmem:[%s426 + $0x170] sm:$0xff]
        %v858 = vld [vmem:[%s426 + $0x178] sm:$0xff]
        %v859 = vld [vmem:[%s426 + $0x180] sm:$0xff]
        %v860 = vld [vmem:[%s426 + $0x188] sm:$0xff]
        %v861 = vld [vmem:[%s426 + $0x190] sm:$0xff]
        %v862 = vld [vmem:[%s426 + $0x198] sm:$0xff]
        %v863 = vld [vmem:[%s426 + $0x1a0] sm:$0xff]
        %v864 = vld [vmem:[%s426 + $0x1a8] sm:$0xff]
        %v865 = vld [vmem:[%s426 + $0x1b0] sm:$0xff]
        %v866 = vld [vmem:[%s426 + $0x1b8] sm:$0xff]
        %v867 = vld [vmem:[%s426 + $0x1c0] sm:$0xff]
        %v868 = vld [vmem:[%s426 + $0x1c8] sm:$0xff]
        %v869 = vld [vmem:[%s426 + $0x1d0] sm:$0xff]
        %v870 = vld [vmem:[%s426 + $0x1d8] sm:$0xff]
        %v871 = vld [vmem:[%s426 + $0x1e0] sm:$0xff]
        %v872 = vld [vmem:[%s426 + $0x1e8] sm:$0xff]
        %v873 = vld [vmem:[%s426 + $0x1f0] sm:$0xff]
        %v874 = vld [vmem:[%s426 + $0x1f8] sm:$0xff]
        %v875 = vld [vmem:[%s496] sm:$0x3]
        %v877 = vlaneseq
        %v878 = vshrl.u32 %v877, 7
        %v879 = vsub.s32 0, %v878
        %v880 = vrot.slane %v875, %v879
        %v881 = vlaneseq
        %v882 = vshrl.u32 %v881, 7
        %v883 = vsub.s32 1, %v882
        %v884 = vrot.slane %v875, %v883
        %887 = vmatprep.subr.mxu0 %v812
        %888 = vmatpush1.msra.mxu0 %v811
        %889 = vmatprep.subr.mxu0 %v814
        %890 = vmatpush1.msra.mxu0 %v813
        %891 = vmatprep.subr.mxu0 %v816
        %892 = vmatpush1.msra.mxu0 %v815
        %893 = vmatprep.subr.mxu0 %v818
        %894 = vmatpush1.msra.mxu0 %v817
        %895 = vmatprep.subr.mxu0 %v820
        %896 = vmatpush1.msra.mxu0 %v819
        %897 = vmatprep.subr.mxu0 %v822
        %898 = vmatpush1.msra.mxu0 %v821
        %899 = vmatprep.subr.mxu0 %v824
        %900 = vmatpush1.msra.mxu0 %v823
        %901 = vmatprep.subr.mxu0 %v826
        %902 = vmatpush1.msra.mxu0 %v825
        %903 = vmatprep.subr.mxu0 %v828
        %904 = vmatpush1.msra.mxu0 %v827
        %905 = vmatprep.subr.mxu0 %v830
        %906 = vmatpush1.msra.mxu0 %v829
        %907 = vmatprep.subr.mxu0 %v832
        %908 = vmatpush1.msra.mxu0 %v831
        %909 = vmatprep.subr.mxu0 %v834
        %910 = vmatpush1.msra.mxu0 %v833
        %911 = vmatprep.subr.mxu0 %v836
        %912 = vmatpush1.msra.mxu0 %v835
        %913 = vmatprep.subr.mxu0 %v838
        %914 = vmatpush1.msra.mxu0 %v837
        %915 = vmatprep.subr.mxu0 %v840
        %916 = vmatpush1.msra.mxu0 %v839
        %917 = vmatprep.subr.mxu0 %v842
        %918 = vmatpush1.msra.mxu0 %v841
        %919 = vmatprep.subr.mxu0 %v844
        %920 = vmatpush1.msra.mxu0 %v843
        %921 = vmatprep.subr.mxu0 %v846
        %922 = vmatpush1.msra.mxu0 %v845
        %923 = vmatprep.subr.mxu0 %v848
        %924 = vmatpush1.msra.mxu0 %v847
        %925 = vmatprep.subr.mxu0 %v850
        %926 = vmatpush1.msra.mxu0 %v849
        %927 = vmatprep.subr.mxu0 %v852
        %928 = vmatpush1.msra.mxu0 %v851
        %929 = vmatprep.subr.mxu0 %v854
        %930 = vmatpush1.msra.mxu0 %v853
        %931 = vmatprep.subr.mxu0 %v856
        %932 = vmatpush1.msra.mxu0 %v855
        %933 = vmatprep.subr.mxu0 %v858
        %934 = vmatpush1.msra.mxu0 %v857
        %935 = vmatprep.subr.mxu0 %v860
        %936 = vmatpush1.msra.mxu0 %v859
        %937 = vmatprep.subr.mxu0 %v862
        %938 = vmatpush1.msra.mxu0 %v861
        %939 = vmatprep.subr.mxu0 %v864
        %940 = vmatpush1.msra.mxu0 %v863
        %941 = vmatprep.subr.mxu0 %v866
        %942 = vmatpush1.msra.mxu0 %v865
        %943 = vmatprep.subr.mxu0 %v868
        %944 = vmatpush1.msra.mxu0 %v867
        %945 = vmatprep.subr.mxu0 %v870
        %946 = vmatpush1.msra.mxu0 %v869
        %947 = vmatprep.subr.mxu0 %v872
        %948 = vmatpush1.msra.mxu0 %v871
        %949 = vmatprep.subr.mxu0 %v874
        %950 = vmatpush1.msra.mxu0 %v873
        %951 = vmatprep.mubr.f32.mxu0 %v810
        %952 = vmatmul.mubr.f32.gmra.mrb[0].mxu0 %v809
        %v953 = vpop.f32.mrb[0].mxu0
        %v954 = vadd.f32 %v880, %v953
        %v955 = vpop.f32.mrb[0].mxu0
        %v956 = vadd.f32 %v884, %v955
        %957 = vdwg.mxu0
        %v960 = vcombine.low %v954, %v956
        %v962 = vunpack.c.l.s4 1983009808
        %v963 = vunpack.c.0.s8 %v962
        %v964 = vlaneseq
        %v965 = vshrl.u32 %v964, 7
        %v966 = vsub.s32 %v963, %v965
        %v967 = vrot.slane %v960, %v966
        %969 = vst [vmem:[%s481] sm:$0xf] %v967
        %s970 = scalar_lea.vmem %s399, 512 [#allocation5]
        %v971 = vld [vmem:[%s970] sm:$0xff]
        %v972 = vld [vmem:[%s970 + $0x8] sm:$0xff]
        %v973 = vld [vmem:[%s970 + $0x10] sm:$0xff]
        %v974 = vld [vmem:[%s970 + $0x18] sm:$0xff]
        %v975 = vld [vmem:[%s970 + $0x20] sm:$0xff]
        %v976 = vld [vmem:[%s970 + $0x28] sm:$0xff]
        %v977 = vld [vmem:[%s970 + $0x30] sm:$0xff]
        %v978 = vld [vmem:[%s970 + $0x38] sm:$0xff]
        %v979 = vld [vmem:[%s970 + $0x40] sm:$0xff]
        %v980 = vld [vmem:[%s970 + $0x48] sm:$0xff]
        %v981 = vld [vmem:[%s970 + $0x50] sm:$0xff]
        %v982 = vld [vmem:[%s970 + $0x58] sm:$0xff]
        %v983 = vld [vmem:[%s970 + $0x60] sm:$0xff]
        %v984 = vld [vmem:[%s970 + $0x68] sm:$0xff]
        %v985 = vld [vmem:[%s970 + $0x70] sm:$0xff]
        %v986 = vld [vmem:[%s970 + $0x78] sm:$0xff]
        %v987 = vld [vmem:[%s970 + $0x80] sm:$0xff]
        %v988 = vld [vmem:[%s970 + $0x88] sm:$0xff]
        %v989 = vld [vmem:[%s970 + $0x90] sm:$0xff]
        %v990 = vld [vmem:[%s970 + $0x98] sm:$0xff]
        %v991 = vld [vmem:[%s970 + $0xa0] sm:$0xff]
        %v992 = vld [vmem:[%s970 + $0xa8] sm:$0xff]
        %v993 = vld [vmem:[%s970 + $0xb0] sm:$0xff]
        %v994 = vld [vmem:[%s970 + $0xb8] sm:$0xff]
        %v995 = vld [vmem:[%s970 + $0xc0] sm:$0xff]
        %v996 = vld [vmem:[%s970 + $0xc8] sm:$0xff]
        %v997 = vld [vmem:[%s970 + $0xd0] sm:$0xff]
        %v998 = vld [vmem:[%s970 + $0xd8] sm:$0xff]
        %v999 = vld [vmem:[%s970 + $0xe0] sm:$0xff]
        %v1000 = vld [vmem:[%s970 + $0xe8] sm:$0xff]
        %v1001 = vld [vmem:[%s970 + $0xf0] sm:$0xff]
        %v1002 = vld [vmem:[%s970 + $0xf8] sm:$0xff]
        %v1003 = vld [vmem:[%s970 + $0x100] sm:$0xff]
        %v1004 = vld [vmem:[%s970 + $0x108] sm:$0xff]
        %v1005 = vld [vmem:[%s970 + $0x110] sm:$0xff]
        %v1006 = vld [vmem:[%s970 + $0x118] sm:$0xff]
        %v1007 = vld [vmem:[%s970 + $0x120] sm:$0xff]
        %v1008 = vld [vmem:[%s970 + $0x128] sm:$0xff]
        %v1009 = vld [vmem:[%s970 + $0x130] sm:$0xff]
        %v1010 = vld [vmem:[%s970 + $0x138] sm:$0xff]
        %v1011 = vld [vmem:[%s970 + $0x140] sm:$0xff]
        %v1012 = vld [vmem:[%s970 + $0x148] sm:$0xff]
        %v1013 = vld [vmem:[%s970 + $0x150] sm:$0xff]
        %v1014 = vld [vmem:[%s970 + $0x158] sm:$0xff]
        %v1015 = vld [vmem:[%s970 + $0x160] sm:$0xff]
        %v1016 = vld [vmem:[%s970 + $0x168] sm:$0xff]
        %v1017 = vld [vmem:[%s970 + $0x170] sm:$0xff]
        %v1018 = vld [vmem:[%s970 + $0x178] sm:$0xff]
        %v1019 = vld [vmem:[%s970 + $0x180] sm:$0xff]
        %v1020 = vld [vmem:[%s970 + $0x188] sm:$0xff]
        %v1021 = vld [vmem:[%s970 + $0x190] sm:$0xff]
        %v1022 = vld [vmem:[%s970 + $0x198] sm:$0xff]
        %v1023 = vld [vmem:[%s970 + $0x1a0] sm:$0xff]
        %v1024 = vld [vmem:[%s970 + $0x1a8] sm:$0xff]
        %v1025 = vld [vmem:[%s970 + $0x1b0] sm:$0xff]
        %v1026 = vld [vmem:[%s970 + $0x1b8] sm:$0xff]
        %v1027 = vld [vmem:[%s970 + $0x1c0] sm:$0xff]
        %v1028 = vld [vmem:[%s970 + $0x1c8] sm:$0xff]
        %v1029 = vld [vmem:[%s970 + $0x1d0] sm:$0xff]
        %v1030 = vld [vmem:[%s970 + $0x1d8] sm:$0xff]
        %v1031 = vld [vmem:[%s970 + $0x1e0] sm:$0xff]
        %v1032 = vld [vmem:[%s970 + $0x1e8] sm:$0xff]
        %v1033 = vld [vmem:[%s970 + $0x1f0] sm:$0xff]
        %v1034 = vld [vmem:[%s970 + $0x1f8] sm:$0xff]
        %s1035 = scalar_lea.vmem %s408, 2 [#allocation7]
        %v1036 = vld [vmem:[%s1035] sm:$0x3]
        %v1038 = vlaneseq
        %v1039 = vshrl.u32 %v1038, 7
        %v1040 = vsub.s32 0, %v1039
        %v1041 = vrot.slane %v1036, %v1040
        %v1042 = vlaneseq
        %v1043 = vshrl.u32 %v1042, 7
        %v1044 = vsub.s32 1, %v1043
        %v1045 = vrot.slane %v1036, %v1044
        %1048 = vmatprep.subr.mxu0 %v972
        %1049 = vmatpush1.msra.mxu0 %v971
        %1050 = vmatprep.subr.mxu0 %v974
        %1051 = vmatpush1.msra.mxu0 %v973
        %1052 = vmatprep.subr.mxu0 %v976
        %1053 = vmatpush1.msra.mxu0 %v975
        %1054 = vmatprep.subr.mxu0 %v978
        %1055 = vmatpush1.msra.mxu0 %v977
        %1056 = vmatprep.subr.mxu0 %v980
        %1057 = vmatpush1.msra.mxu0 %v979
        %1058 = vmatprep.subr.mxu0 %v982
        %1059 = vmatpush1.msra.mxu0 %v981
        %1060 = vmatprep.subr.mxu0 %v984
        %1061 = vmatpush1.msra.mxu0 %v983
        %1062 = vmatprep.subr.mxu0 %v986
        %1063 = vmatpush1.msra.mxu0 %v985
        %1064 = vmatprep.subr.mxu0 %v988
        %1065 = vmatpush1.msra.mxu0 %v987
        %1066 = vmatprep.subr.mxu0 %v990
        %1067 = vmatpush1.msra.mxu0 %v989
        %1068 = vmatprep.subr.mxu0 %v992
        %1069 = vmatpush1.msra.mxu0 %v991
        %1070 = vmatprep.subr.mxu0 %v994
        %1071 = vmatpush1.msra.mxu0 %v993
        %1072 = vmatprep.subr.mxu0 %v996
        %1073 = vmatpush1.msra.mxu0 %v995
        %1074 = vmatprep.subr.mxu0 %v998
        %1075 = vmatpush1.msra.mxu0 %v997
        %1076 = vmatprep.subr.mxu0 %v1000
        %1077 = vmatpush1.msra.mxu0 %v999
        %1078 = vmatprep.subr.mxu0 %v1002
        %1079 = vmatpush1.msra.mxu0 %v1001
        %1080 = vmatprep.subr.mxu0 %v1004
        %1081 = vmatpush1.msra.mxu0 %v1003
        %1082 = vmatprep.subr.mxu0 %v1006
        %1083 = vmatpush1.msra.mxu0 %v1005
        %1084 = vmatprep.subr.mxu0 %v1008
        %1085 = vmatpush1.msra.mxu0 %v1007
        %1086 = vmatprep.subr.mxu0 %v1010
        %1087 = vmatpush1.msra.mxu0 %v1009
        %1088 = vmatprep.subr.mxu0 %v1012
        %1089 = vmatpush1.msra.mxu0 %v1011
        %1090 = vmatprep.subr.mxu0 %v1014
        %1091 = vmatpush1.msra.mxu0 %v1013
        %1092 = vmatprep.subr.mxu0 %v1016
        %1093 = vmatpush1.msra.mxu0 %v1015
        %1094 = vmatprep.subr.mxu0 %v1018
        %1095 = vmatpush1.msra.mxu0 %v1017
        %1096 = vmatprep.subr.mxu0 %v1020
        %1097 = vmatpush1.msra.mxu0 %v1019
        %1098 = vmatprep.subr.mxu0 %v1022
        %1099 = vmatpush1.msra.mxu0 %v1021
        %1100 = vmatprep.subr.mxu0 %v1024
        %1101 = vmatpush1.msra.mxu0 %v1023
        %1102 = vmatprep.subr.mxu0 %v1026
        %1103 = vmatpush1.msra.mxu0 %v1025
        %1104 = vmatprep.subr.mxu0 %v1028
        %1105 = vmatpush1.msra.mxu0 %v1027
        %1106 = vmatprep.subr.mxu0 %v1030
        %1107 = vmatpush1.msra.mxu0 %v1029
        %1108 = vmatprep.subr.mxu0 %v1032
        %1109 = vmatpush1.msra.mxu0 %v1031
        %1110 = vmatprep.subr.mxu0 %v1034
        %1111 = vmatpush1.msra.mxu0 %v1033
        %1112 = vmatprep.mubr.f32.mxu0 %v584
        %1113 = vmatmul.mubr.f32.gmra.mrb[0].mxu0 %v583
        %v1114 = vpop.f32.mrb[0].mxu0
        %v1115 = vadd.f32 %v1041, %v1114
        %v1116 = vpop.f32.mrb[0].mxu0
        %v1117 = vadd.f32 %v1045, %v1116
        %1118 = vdwg.mxu0
        %v1119 = vmax.f32 %v1115, 0.0
        %v1120 = vmax.f32 %v1117, 0.0
        %s1121 = scalar_lea.vmem %s417, 512 [#allocation8]
        %v1122 = vld [vmem:[%s1121] sm:$0xff]
        %v1123 = vld [vmem:[%s1121 + $0x8] sm:$0xff]
        %v1124 = vld [vmem:[%s1121 + $0x10] sm:$0xff]
        %v1125 = vld [vmem:[%s1121 + $0x18] sm:$0xff]
        %v1126 = vld [vmem:[%s1121 + $0x20] sm:$0xff]
        %v1127 = vld [vmem:[%s1121 + $0x28] sm:$0xff]
        %v1128 = vld [vmem:[%s1121 + $0x30] sm:$0xff]
        %v1129 = vld [vmem:[%s1121 + $0x38] sm:$0xff]
        %v1130 = vld [vmem:[%s1121 + $0x40] sm:$0xff]
        %v1131 = vld [vmem:[%s1121 + $0x48] sm:$0xff]
        %v1132 = vld [vmem:[%s1121 + $0x50] sm:$0xff]
        %v1133 = vld [vmem:[%s1121 + $0x58] sm:$0xff]
        %v1134 = vld [vmem:[%s1121 + $0x60] sm:$0xff]
        %v1135 = vld [vmem:[%s1121 + $0x68] sm:$0xff]
        %v1136 = vld [vmem:[%s1121 + $0x70] sm:$0xff]
        %v1137 = vld [vmem:[%s1121 + $0x78] sm:$0xff]
        %v1138 = vld [vmem:[%s1121 + $0x80] sm:$0xff]
        %v1139 = vld [vmem:[%s1121 + $0x88] sm:$0xff]
        %v1140 = vld [vmem:[%s1121 + $0x90] sm:$0xff]
        %v1141 = vld [vmem:[%s1121 + $0x98] sm:$0xff]
        %v1142 = vld [vmem:[%s1121 + $0xa0] sm:$0xff]
        %v1143 = vld [vmem:[%s1121 + $0xa8] sm:$0xff]
        %v1144 = vld [vmem:[%s1121 + $0xb0] sm:$0xff]
        %v1145 = vld [vmem:[%s1121 + $0xb8] sm:$0xff]
        %v1146 = vld [vmem:[%s1121 + $0xc0] sm:$0xff]
        %v1147 = vld [vmem:[%s1121 + $0xc8] sm:$0xff]
        %v1148 = vld [vmem:[%s1121 + $0xd0] sm:$0xff]
        %v1149 = vld [vmem:[%s1121 + $0xd8] sm:$0xff]
        %v1150 = vld [vmem:[%s1121 + $0xe0] sm:$0xff]
        %v1151 = vld [vmem:[%s1121 + $0xe8] sm:$0xff]
        %v1152 = vld [vmem:[%s1121 + $0xf0] sm:$0xff]
        %v1153 = vld [vmem:[%s1121 + $0xf8] sm:$0xff]
        %v1154 = vld [vmem:[%s1121 + $0x100] sm:$0xff]
        %v1155 = vld [vmem:[%s1121 + $0x108] sm:$0xff]
        %v1156 = vld [vmem:[%s1121 + $0x110] sm:$0xff]
        %v1157 = vld [vmem:[%s1121 + $0x118] sm:$0xff]
        %v1158 = vld [vmem:[%s1121 + $0x120] sm:$0xff]
        %v1159 = vld [vmem:[%s1121 + $0x128] sm:$0xff]
        %v1160 = vld [vmem:[%s1121 + $0x130] sm:$0xff]
        %v1161 = vld [vmem:[%s1121 + $0x138] sm:$0xff]
        %v1162 = vld [vmem:[%s1121 + $0x140] sm:$0xff]
        %v1163 = vld [vmem:[%s1121 + $0x148] sm:$0xff]
        %v1164 = vld [vmem:[%s1121 + $0x150] sm:$0xff]
        %v1165 = vld [vmem:[%s1121 + $0x158] sm:$0xff]
        %v1166 = vld [vmem:[%s1121 + $0x160] sm:$0xff]
        %v1167 = vld [vmem:[%s1121 + $0x168] sm:$0xff]
        %v1168 = vld [vmem:[%s1121 + $0x170] sm:$0xff]
        %v1169 = vld [vmem:[%s1121 + $0x178] sm:$0xff]
        %v1170 = vld [vmem:[%s1121 + $0x180] sm:$0xff]
        %v1171 = vld [vmem:[%s1121 + $0x188] sm:$0xff]
        %v1172 = vld [vmem:[%s1121 + $0x190] sm:$0xff]
        %v1173 = vld [vmem:[%s1121 + $0x198] sm:$0xff]
        %v1174 = vld [vmem:[%s1121 + $0x1a0] sm:$0xff]
        %v1175 = vld [vmem:[%s1121 + $0x1a8] sm:$0xff]
        %v1176 = vld [vmem:[%s1121 + $0x1b0] sm:$0xff]
        %v1177 = vld [vmem:[%s1121 + $0x1b8] sm:$0xff]
        %v1178 = vld [vmem:[%s1121 + $0x1c0] sm:$0xff]
        %v1179 = vld [vmem:[%s1121 + $0x1c8] sm:$0xff]
        %v1180 = vld [vmem:[%s1121 + $0x1d0] sm:$0xff]
        %v1181 = vld [vmem:[%s1121 + $0x1d8] sm:$0xff]
        %v1182 = vld [vmem:[%s1121 + $0x1e0] sm:$0xff]
        %v1183 = vld [vmem:[%s1121 + $0x1e8] sm:$0xff]
        %v1184 = vld [vmem:[%s1121 + $0x1f0] sm:$0xff]
        %v1185 = vld [vmem:[%s1121 + $0x1f8] sm:$0xff]
        %s1186 = scalar_lea.vmem %s489, 2
        %v1187 = vld [vmem:[%s1186] sm:$0x3]
        %v1189 = vlaneseq
        %v1190 = vshrl.u32 %v1189, 7
        %v1191 = vsub.s32 0, %v1190
        %v1192 = vrot.slane %v1187, %v1191
        %v1193 = vlaneseq
        %v1194 = vshrl.u32 %v1193, 7
        %v1195 = vsub.s32 1, %v1194
        %v1196 = vrot.slane %v1187, %v1195
        %1199 = vmatprep.subr.mxu0 %v1123
        %1200 = vmatpush1.msra.mxu0 %v1122
        %1201 = vmatprep.subr.mxu0 %v1125
        %1202 = vmatpush1.msra.mxu0 %v1124
        %1203 = vmatprep.subr.mxu0 %v1127
        %1204 = vmatpush1.msra.mxu0 %v1126
        %1205 = vmatprep.subr.mxu0 %v1129
        %1206 = vmatpush1.msra.mxu0 %v1128
        %1207 = vmatprep.subr.mxu0 %v1131
        %1208 = vmatpush1.msra.mxu0 %v1130
        %1209 = vmatprep.subr.mxu0 %v1133
        %1210 = vmatpush1.msra.mxu0 %v1132
        %1211 = vmatprep.subr.mxu0 %v1135
        %1212 = vmatpush1.msra.mxu0 %v1134
        %1213 = vmatprep.subr.mxu0 %v1137
        %1214 = vmatpush1.msra.mxu0 %v1136
        %1215 = vmatprep.subr.mxu0 %v1139
        %1216 = vmatpush1.msra.mxu0 %v1138
        %1217 = vmatprep.subr.mxu0 %v1141
        %1218 = vmatpush1.msra.mxu0 %v1140
        %1219 = vmatprep.subr.mxu0 %v1143
        %1220 = vmatpush1.msra.mxu0 %v1142
        %1221 = vmatprep.subr.mxu0 %v1145
        %1222 = vmatpush1.msra.mxu0 %v1144
        %1223 = vmatprep.subr.mxu0 %v1147
        %1224 = vmatpush1.msra.mxu0 %v1146
        %1225 = vmatprep.subr.mxu0 %v1149
        %1226 = vmatpush1.msra.mxu0 %v1148
        %1227 = vmatprep.subr.mxu0 %v1151
        %1228 = vmatpush1.msra.mxu0 %v1150
        %1229 = vmatprep.subr.mxu0 %v1153
        %1230 = vmatpush1.msra.mxu0 %v1152
        %1231 = vmatprep.subr.mxu0 %v1155
        %1232 = vmatpush1.msra.mxu0 %v1154
        %1233 = vmatprep.subr.mxu0 %v1157
        %1234 = vmatpush1.msra.mxu0 %v1156
        %1235 = vmatprep.subr.mxu0 %v1159
        %1236 = vmatpush1.msra.mxu0 %v1158
        %1237 = vmatprep.subr.mxu0 %v1161
        %1238 = vmatpush1.msra.mxu0 %v1160
        %1239 = vmatprep.subr.mxu0 %v1163
        %1240 = vmatpush1.msra.mxu0 %v1162
        %1241 = vmatprep.subr.mxu0 %v1165
        %1242 = vmatpush1.msra.mxu0 %v1164
        %1243 = vmatprep.subr.mxu0 %v1167
        %1244 = vmatpush1.msra.mxu0 %v1166
        %1245 = vmatprep.subr.mxu0 %v1169
        %1246 = vmatpush1.msra.mxu0 %v1168
        %1247 = vmatprep.subr.mxu0 %v1171
        %1248 = vmatpush1.msra.mxu0 %v1170
        %1249 = vmatprep.subr.mxu0 %v1173
        %1250 = vmatpush1.msra.mxu0 %v1172
        %1251 = vmatprep.subr.mxu0 %v1175
        %1252 = vmatpush1.msra.mxu0 %v1174
        %1253 = vmatprep.subr.mxu0 %v1177
        %1254 = vmatpush1.msra.mxu0 %v1176
        %1255 = vmatprep.subr.mxu0 %v1179
        %1256 = vmatpush1.msra.mxu0 %v1178
        %1257 = vmatprep.subr.mxu0 %v1181
        %1258 = vmatpush1.msra.mxu0 %v1180
        %1259 = vmatprep.subr.mxu0 %v1183
        %1260 = vmatpush1.msra.mxu0 %v1182
        %1261 = vmatprep.subr.mxu0 %v1185
        %1262 = vmatpush1.msra.mxu0 %v1184
        %1263 = vmatprep.mubr.f32.mxu0 %v1120
        %1264 = vmatmul.mubr.f32.gmra.mrb[0].mxu0 %v1119
        %v1265 = vpop.f32.mrb[0].mxu0
        %v1266 = vadd.f32 %v1192, %v1265
        %v1267 = vpop.f32.mrb[0].mxu0
        %v1268 = vadd.f32 %v1196, %v1267
        %1269 = vdwg.mxu0
        %v1270 = vmax.f32 %v1266, 0.0
        %v1271 = vmax.f32 %v1268, 0.0
        %v1272 = vadd.f32 %v1270, %v583
        %v1273 = vadd.f32 %v1271, %v584
        %s1274 = scalar_lea.vmem %s426, 512 [#allocation10]
        %v1275 = vld [vmem:[%s1274] sm:$0xff]
        %v1276 = vld [vmem:[%s1274 + $0x8] sm:$0xff]
        %v1277 = vld [vmem:[%s1274 + $0x10] sm:$0xff]
        %v1278 = vld [vmem:[%s1274 + $0x18] sm:$0xff]
        %v1279 = vld [vmem:[%s1274 + $0x20] sm:$0xff]
        %v1280 = vld [vmem:[%s1274 + $0x28] sm:$0xff]
        %v1281 = vld [vmem:[%s1274 + $0x30] sm:$0xff]
        %v1282 = vld [vmem:[%s1274 + $0x38] sm:$0xff]
        %v1283 = vld [vmem:[%s1274 + $0x40] sm:$0xff]
        %v1284 = vld [vmem:[%s1274 + $0x48] sm:$0xff]
        %v1285 = vld [vmem:[%s1274 + $0x50] sm:$0xff]
        %v1286 = vld [vmem:[%s1274 + $0x58] sm:$0xff]
        %v1287 = vld [vmem:[%s1274 + $0x60] sm:$0xff]
        %v1288 = vld [vmem:[%s1274 + $0x68] sm:$0xff]
        %v1289 = vld [vmem:[%s1274 + $0x70] sm:$0xff]
        %v1290 = vld [vmem:[%s1274 + $0x78] sm:$0xff]
        %v1291 = vld [vmem:[%s1274 + $0x80] sm:$0xff]
        %v1292 = vld [vmem:[%s1274 + $0x88] sm:$0xff]
        %v1293 = vld [vmem:[%s1274 + $0x90] sm:$0xff]
        %v1294 = vld [vmem:[%s1274 + $0x98] sm:$0xff]
        %v1295 = vld [vmem:[%s1274 + $0xa0] sm:$0xff]
        %v1296 = vld [vmem:[%s1274 + $0xa8] sm:$0xff]
        %v1297 = vld [vmem:[%s1274 + $0xb0] sm:$0xff]
        %v1298 = vld [vmem:[%s1274 + $0xb8] sm:$0xff]
        %v1299 = vld [vmem:[%s1274 + $0xc0] sm:$0xff]
        %v1300 = vld [vmem:[%s1274 + $0xc8] sm:$0xff]
        %v1301 = vld [vmem:[%s1274 + $0xd0] sm:$0xff]
        %v1302 = vld [vmem:[%s1274 + $0xd8] sm:$0xff]
        %v1303 = vld [vmem:[%s1274 + $0xe0] sm:$0xff]
        %v1304 = vld [vmem:[%s1274 + $0xe8] sm:$0xff]
        %v1305 = vld [vmem:[%s1274 + $0xf0] sm:$0xff]
        %v1306 = vld [vmem:[%s1274 + $0xf8] sm:$0xff]
        %v1307 = vld [vmem:[%s1274 + $0x100] sm:$0xff]
        %v1308 = vld [vmem:[%s1274 + $0x108] sm:$0xff]
        %v1309 = vld [vmem:[%s1274 + $0x110] sm:$0xff]
        %v1310 = vld [vmem:[%s1274 + $0x118] sm:$0xff]
        %v1311 = vld [vmem:[%s1274 + $0x120] sm:$0xff]
        %v1312 = vld [vmem:[%s1274 + $0x128] sm:$0xff]
        %v1313 = vld [vmem:[%s1274 + $0x130] sm:$0xff]
        %v1314 = vld [vmem:[%s1274 + $0x138] sm:$0xff]
        %v1315 = vld [vmem:[%s1274 + $0x140] sm:$0xff]
        %v1316 = vld [vmem:[%s1274 + $0x148] sm:$0xff]
        %v1317 = vld [vmem:[%s1274 + $0x150] sm:$0xff]
        %v1318 = vld [vmem:[%s1274 + $0x158] sm:$0xff]
        %v1319 = vld [vmem:[%s1274 + $0x160] sm:$0xff]
        %v1320 = vld [vmem:[%s1274 + $0x168] sm:$0xff]
        %v1321 = vld [vmem:[%s1274 + $0x170] sm:$0xff]
        %v1322 = vld [vmem:[%s1274 + $0x178] sm:$0xff]
        %v1323 = vld [vmem:[%s1274 + $0x180] sm:$0xff]
        %v1324 = vld [vmem:[%s1274 + $0x188] sm:$0xff]
        %v1325 = vld [vmem:[%s1274 + $0x190] sm:$0xff]
        %v1326 = vld [vmem:[%s1274 + $0x198] sm:$0xff]
        %v1327 = vld [vmem:[%s1274 + $0x1a0] sm:$0xff]
        %v1328 = vld [vmem:[%s1274 + $0x1a8] sm:$0xff]
        %v1329 = vld [vmem:[%s1274 + $0x1b0] sm:$0xff]
        %v1330 = vld [vmem:[%s1274 + $0x1b8] sm:$0xff]
        %v1331 = vld [vmem:[%s1274 + $0x1c0] sm:$0xff]
        %v1332 = vld [vmem:[%s1274 + $0x1c8] sm:$0xff]
        %v1333 = vld [vmem:[%s1274 + $0x1d0] sm:$0xff]
        %v1334 = vld [vmem:[%s1274 + $0x1d8] sm:$0xff]
        %v1335 = vld [vmem:[%s1274 + $0x1e0] sm:$0xff]
        %v1336 = vld [vmem:[%s1274 + $0x1e8] sm:$0xff]
        %v1337 = vld [vmem:[%s1274 + $0x1f0] sm:$0xff]
        %v1338 = vld [vmem:[%s1274 + $0x1f8] sm:$0xff]
        %s1339 = scalar_lea.vmem %s496, 2
        %v1340 = vld [vmem:[%s1339] sm:$0x3]
        %v1342 = vlaneseq
        %v1343 = vshrl.u32 %v1342, 7
        %v1344 = vsub.s32 0, %v1343
        %v1345 = vrot.slane %v1340, %v1344
        %v1346 = vlaneseq
        %v1347 = vshrl.u32 %v1346, 7
        %v1348 = vsub.s32 1, %v1347
        %v1349 = vrot.slane %v1340, %v1348
        %1352 = vmatprep.subr.mxu0 %v1276
        %1353 = vmatpush1.msra.mxu0 %v1275
        %1354 = vmatprep.subr.mxu0 %v1278
        %1355 = vmatpush1.msra.mxu0 %v1277
        %1356 = vmatprep.subr.mxu0 %v1280
        %1357 = vmatpush1.msra.mxu0 %v1279
        %1358 = vmatprep.subr.mxu0 %v1282
        %1359 = vmatpush1.msra.mxu0 %v1281
        %1360 = vmatprep.subr.mxu0 %v1284
        %1361 = vmatpush1.msra.mxu0 %v1283
        %1362 = vmatprep.subr.mxu0 %v1286
        %1363 = vmatpush1.msra.mxu0 %v1285
        %1364 = vmatprep.subr.mxu0 %v1288
        %1365 = vmatpush1.msra.mxu0 %v1287
        %1366 = vmatprep.subr.mxu0 %v1290
        %1367 = vmatpush1.msra.mxu0 %v1289
        %1368 = vmatprep.subr.mxu0 %v1292
        %1369 = vmatpush1.msra.mxu0 %v1291
        %1370 = vmatprep.subr.mxu0 %v1294
        %1371 = vmatpush1.msra.mxu0 %v1293
        %1372 = vmatprep.subr.mxu0 %v1296
        %1373 = vmatpush1.msra.mxu0 %v1295
        %1374 = vmatprep.subr.mxu0 %v1298
        %1375 = vmatpush1.msra.mxu0 %v1297
        %1376 = vmatprep.subr.mxu0 %v1300
        %1377 = vmatpush1.msra.mxu0 %v1299
        %1378 = vmatprep.subr.mxu0 %v1302
        %1379 = vmatpush1.msra.mxu0 %v1301
        %1380 = vmatprep.subr.mxu0 %v1304
        %1381 = vmatpush1.msra.mxu0 %v1303
        %1382 = vmatprep.subr.mxu0 %v1306
        %1383 = vmatpush1.msra.mxu0 %v1305
        %1384 = vmatprep.subr.mxu0 %v1308
        %1385 = vmatpush1.msra.mxu0 %v1307
        %1386 = vmatprep.subr.mxu0 %v1310
        %1387 = vmatpush1.msra.mxu0 %v1309
        %1388 = vmatprep.subr.mxu0 %v1312
        %1389 = vmatpush1.msra.mxu0 %v1311
        %1390 = vmatprep.subr.mxu0 %v1314
        %1391 = vmatpush1.msra.mxu0 %v1313
        %1392 = vmatprep.subr.mxu0 %v1316
        %1393 = vmatpush1.msra.mxu0 %v1315
        %1394 = vmatprep.subr.mxu0 %v1318
        %1395 = vmatpush1.msra.mxu0 %v1317
        %1396 = vmatprep.subr.mxu0 %v1320
        %1397 = vmatpush1.msra.mxu0 %v1319
        %1398 = vmatprep.subr.mxu0 %v1322
        %1399 = vmatpush1.msra.mxu0 %v1321
        %1400 = vmatprep.subr.mxu0 %v1324
        %1401 = vmatpush1.msra.mxu0 %v1323
        %1402 = vmatprep.subr.mxu0 %v1326
        %1403 = vmatpush1.msra.mxu0 %v1325
        %1404 = vmatprep.subr.mxu0 %v1328
        %1405 = vmatpush1.msra.mxu0 %v1327
        %1406 = vmatprep.subr.mxu0 %v1330
        %1407 = vmatpush1.msra.mxu0 %v1329
        %1408 = vmatprep.subr.mxu0 %v1332
        %1409 = vmatpush1.msra.mxu0 %v1331
        %1410 = vmatprep.subr.mxu0 %v1334
        %1411 = vmatpush1.msra.mxu0 %v1333
        %1412 = vmatprep.subr.mxu0 %v1336
        %1413 = vmatpush1.msra.mxu0 %v1335
        %1414 = vmatprep.subr.mxu0 %v1338
        %1415 = vmatpush1.msra.mxu0 %v1337
        %1416 = vmatprep.mubr.f32.mxu0 %v1273
        %1417 = vmatmul.mubr.f32.gmra.mrb[0].mxu0 %v1272
        %v1418 = vpop.f32.mrb[0].mxu0
        %v1419 = vadd.f32 %v1345, %v1418
        %v1420 = vpop.f32.mrb[0].mxu0
        %v1421 = vadd.f32 %v1349, %v1420
        %1422 = vdwg.mxu0
        %v1425 = vcombine.low %v1419, %v1421
        %v1427 = vunpack.c.l.s4 1983009808
        %v1428 = vunpack.c.0.s8 %v1427
        %v1429 = vlaneseq
        %v1430 = vshrl.u32 %v1429, 7
        %v1431 = vsub.s32 %v1428, %v1430
        %v1432 = vrot.slane %v1425, %v1431
        %s1434 = scalar_lea.vmem %s481, 4 [#allocation11]
        %1435 = vst [vmem:[%s1434] sm:$0xf] %v1432
        %s1436 = sand.u32 %s232, 1
        %s1437 = scalar_lea.sflag [#allocation4], %s1436
        %s1438 = sand.u32 %s232, 1
        %s1439 = smul.addr %s1438, 8
        %s1440 = scalar_lea.vmem [#allocation11], %s1439
        // Predicated region
        $region69: #{tpu_custom_call.1} parent=47 // pred_check
          %p1441 = pneg %p242
        $region70: #{tpu_custom_call.1} parent=47 // pred_check_branch
          %1443 = sbr.rel (%p1441) target = $region72
        $region71: #{tpu_custom_call.1} parent=47 // pred_region
          %s1444 = smul.u32 2, %s32
          %s1446 = ssub.s32 128, 128
          %1447 = vsyncadd %s1437, %s1446
          %s1448 = smul.addr %s33, 2
          %s1449 = smul.addr %s1444, 2
          %s1450 = sadd.s32 %s1448, %s1449
          %s1451 = smul.addr %s1450, 32
          %s1452 = scalar_lea.hbm %s7, %s1451
          %s1453 = sshll.u32 %s1440, 4
          %s1454 = int_to_ptr.vmem [resolvable:$true] %s1453
          %1459 = dma.vmem_to_hbm [thread:$0]  %s1454, 128, %s1452, %s1437, 64, 64, 4
        $region72: #{tpu_custom_call.1} parent=47 // pred_fallthru
          _
      $region48: #{tpu_custom_call.1} parent=5 // pred_fallthru
        _
      %p1460 = scmp.le.s32.totalorder 2, %s23
      // Predicated region
      $region73: #{tpu_custom_call.1} parent=5 // pred_check
        %p1461 = pneg %p1460
      $region74: #{tpu_custom_call.1} parent=5 // pred_check_branch
        %1463 = sbr.rel (%p1461) target = $region76
      $region75: #{tpu_custom_call.1} parent=5 // pred_region
        %s1464 = ssub.s32 %s23, 2
        // Predicated region
        $region77: #{tpu_custom_call.1} parent=75 // pred_check
          %p1465 = pneg %p248
        $region78: #{tpu_custom_call.1} parent=75 // pred_check_branch
          %1467 = sbr.rel (%p1465) target = $region80
        $region79: #{tpu_custom_call.1} parent=75 // pred_region
          %s1468 = sand.u32 %s233, 1
          %s1469 = scalar_lea.sflag [#allocation4], %s1468
          %s1470 = sand.u32 %s233, 1
          %s1471 = smul.addr %s1470, 8
          %s1472 = scalar_lea.vmem [#allocation11], %s1471
          %1473 = dma.done %s1469, 128
        $region80: #{tpu_custom_call.1} parent=75 // pred_fallthru
          _
      $region76: #{tpu_custom_call.1} parent=5 // pred_fallthru
        _
    $region6: #{tpu_custom_call.1} parent=1 // loop_footer
      %s27 = sadd.s32 1, %s23
    $region7: #{tpu_custom_call.1} parent=1 // loop_footer_branch
      %22 = sbr.rel target = $region3
    $region8: #{tpu_custom_call.1} parent=1 // loop_exit
      _
    %1474 = vsyncpa [#allocation3], 1
    %s1475 = scalar_lea.sflag [#allocation3], 1
    %1476 = vsyncpa %s1475, 1
    %1477 = vsyncpa [#allocation6], 1
    %s1478 = scalar_lea.sflag [#allocation6], 1
    %1479 = vsyncpa %s1478, 1
    %1480 = vsyncpa [#allocation9], 1
    %s1481 = scalar_lea.sflag [#allocation9], 1
    %1482 = vsyncpa %s1481, 1
    %1483 = vsyncpa [#allocation4], 1
    %s1484 = scalar_lea.sflag [#allocation4], 1
    %1485 = vsyncpa %s1484, 1

</llo_original>
